<compile_context>
chip_gen: v5e
topology: v5e:2x2
jax: 0.10.0
libtpu: 0.0.40
codegen_flags: <defaults>
</compile_context>

<pallas_src>
import functools

import jax
import jax.numpy as jnp
from jax import lax
from jax.experimental import pallas as pl
from jax.experimental.pallas import tpu as pltpu


# --------------------------------------------------------------------------
# Tiled dense kernel: y = act(x @ Wt + b), gridded over rows N.
# --------------------------------------------------------------------------
def _dense_kernel(x_ref, wt_ref, b_ref, o_ref, *, activation):
    y = jnp.dot(x_ref[...], wt_ref[...], preferred_element_type=jnp.float32)
    y = y + b_ref[...]
    if activation == "relu":
        y = jnp.maximum(y, 0.0)
    elif activation == "sigmoid":
        y = jax.nn.sigmoid(y)
    o_ref[...] = y.astype(o_ref.dtype)


def dense(x, wt, b, activation="none", tile_n=512):
    # x: (N, Din); wt: (Din, Dout); b: (Dout,)
    N, Din = x.shape
    Dout = wt.shape[1]
    tn = N if N <= tile_n else tile_n
    grid = (pl.cdiv(N, tn),)
    return pl.pallas_call(
        functools.partial(_dense_kernel, activation=activation),
        out_shape=jax.ShapeDtypeStruct((N, Dout), jnp.float32),
        grid=grid,
        in_specs=[
            pl.BlockSpec((tn, Din), lambda i: (i, 0)),
            pl.BlockSpec((Din, Dout), lambda i: (0, 0)),
            pl.BlockSpec((1, Dout), lambda i: (0, 0)),
        ],
        out_specs=pl.BlockSpec((tn, Dout), lambda i: (i, 0)),
        compiler_params=pltpu.CompilerParams(dimension_semantics=("parallel",)),
    )(x, wt, b.reshape(1, Dout))


# --------------------------------------------------------------------------
# Fused GRU layer kernel (input projection + recurrence in one kernel).
#   x_ref   : (S, Bb, Din)  time-major input block
#   wih_ref : (Din, 3H)     transposed input weights (gate order r, z, n)
#   bx_ref  : (1, 3H)       b_ih with b_hr / b_hz folded in (b_in unchanged)
#   whh_ref : (H, 3H)       transposed hidden weights, gates concatenated
#   bhn_ref : (1, H)        hidden bias of the "new" gate (kept separate)
#   out_ref : (S, Bb, H)
# --------------------------------------------------------------------------
def _gru_kernel(x_ref, wih_ref, bx_ref, whh_ref, bhn_ref, out_ref, h_scr, *, hidden):
    S = x_ref.shape[0]
    H = hidden
    # Re-init per grid step: scratch persists across grid iterations.
    h_scr[...] = jnp.zeros_like(h_scr)

    def step(t, carry):
        xt = x_ref[t]                                                    # (Bb, Din)
        gx = jnp.dot(xt, wih_ref[...], preferred_element_type=jnp.float32) + bx_ref[...]
        h = h_scr[...]
        gh = jnp.dot(h, whh_ref[...], preferred_element_type=jnp.float32)  # one fused matmul
        r = jax.nn.sigmoid(gx[:, :H] + gh[:, :H])
        z = jax.nn.sigmoid(gx[:, H:2 * H] + gh[:, H:2 * H])
        n = jnp.tanh(gx[:, 2 * H:] + r * (gh[:, 2 * H:] + bhn_ref[...]))
        h_new = (1.0 - z) * n + z * h
        h_scr[...] = h_new
        out_ref[t] = h_new.astype(out_ref.dtype)
        return carry

    lax.fori_loop(0, S, step, 0)


def _gru_batch_tile(bt):
    # Two blocks when the batch splits cleanly into >=8-sublane tiles
    # (megacore sharding on v7x); otherwise keep the whole batch in one block
    # so a single-core chip runs only S sequential steps.
    if bt % 16 == 0:
        return bt // 2
    return bt


def gru_layer(x, w_ih, w_hh, b_ih, b_hh):
    # x: (Bt, S, Din) batch-first; w_ih: (3H, Din); w_hh: (3H, H); biases (3H,)
    Bt, S, Din = x.shape
    H = w_hh.shape[1]

    # Fold hidden r/z biases into the input bias (b_hn must stay separate).
    bx = jnp.concatenate([b_ih[:2 * H] + b_hh[:2 * H], b_ih[2 * H:]]).reshape(1, 3 * H)
    bhn = b_hh[2 * H:].reshape(1, H)
    wih_t = w_ih.T                      # (Din, 3H)
    whh_t = w_hh.T                      # (H, 3H)
    xt = x.transpose(1, 0, 2)           # (S, Bt, Din) time-major

    bb = _gru_batch_tile(Bt)
    grid = (Bt // bb,)
    out = pl.pallas_call(
        functools.partial(_gru_kernel, hidden=H),
        out_shape=jax.ShapeDtypeStruct((S, Bt, H), jnp.float32),
        grid=grid,
        in_specs=[
            pl.BlockSpec((S, bb, Din), lambda i: (0, i, 0)),
            pl.BlockSpec((Din, 3 * H), lambda i: (0, 0)),
            pl.BlockSpec((1, 3 * H), lambda i: (0, 0)),
            pl.BlockSpec((H, 3 * H), lambda i: (0, 0)),
            pl.BlockSpec((1, H), lambda i: (0, 0)),
        ],
        out_specs=pl.BlockSpec((S, bb, H), lambda i: (0, i, 0)),
        scratch_shapes=[pltpu.VMEM((bb, H), jnp.float32)],
        compiler_params=pltpu.CompilerParams(dimension_semantics=("parallel",)),
    )(xt, wih_t, bx, whh_t, bhn)
    return out.transpose(1, 0, 2)       # back to (Bt, S, H)


# --------------------------------------------------------------------------
# Conv2d with kernel (1, K), padding 'same' == 1-D conv along the feature/W
# axis, expressed as one MXU matmul against a banded weight matrix.
#   band[ci*Wp + j, co*W + w] = weight[co, ci, 0, j - w]   (0 if out of range)
# --------------------------------------------------------------------------
def _conv_band(weight, W):
    c_out, c_in, _, K = weight.shape
    Wp = W + K - 1
    j = jnp.arange(Wp)[:, None]              # (Wp, 1)
    wpos = jnp.arange(W)[None, :]            # (1, W)
    k = j - wpos                             # (Wp, W)
    valid = (k >= 0) & (k < K)
    kc = jnp.clip(k, 0, K - 1)
    wt = weight[:, :, 0, :]                  # (c_out, c_in, K)
    band4 = wt[:, :, kc]                     # (c_out, c_in, Wp, W)
    band4 = jnp.where(valid[None, None], band4, 0.0)
    return band4.transpose(1, 2, 0, 3).reshape(c_in * Wp, c_out * W)


def conv1d_same_matmul(x, w, b):
    # x: (N, C_in, W); w: (C_out, C_in, 1, K); b: (C_out,) -> (N, C_out, W)
    N, c_in, W = x.shape
    c_out, _, _, K = w.shape
    pad_l = (K - 1) // 2                     # K is odd here (13, 7)
    pad_r = K - 1 - pad_l
    Wp = W + K - 1
    xpad = jnp.pad(x, ((0, 0), (0, 0), (pad_l, pad_r))).reshape(N, c_in * Wp)
    band = _conv_band(w, W)                  # (c_in*Wp, c_out*W)
    brep = jnp.repeat(b, W)                  # (c_out*W,)
    y = dense(xpad, band, brep)              # (N, c_out*W), lane-dense MXU matmul
    return y.reshape(N, c_out, W)


# --------------------------------------------------------------------------
# Fused head: fc2 + ReLU (+ Dropout identity) + fc3 + Sigmoid.
# fc3 has Dout=1, so it is a VPU multiply + lane reduce instead of a matmul.
# --------------------------------------------------------------------------
def _head_kernel(x_ref, w2t_ref, b2_ref, w3_ref, b3_ref, o_ref):
    h = jnp.dot(x_ref[...], w2t_ref[...], preferred_element_type=jnp.float32) + b2_ref[...]
    h = jnp.maximum(h, 0.0)
    o = jnp.sum(h * w3_ref[...], axis=-1, keepdims=True) + b3_ref[...]
    o_ref[...] = jax.nn.sigmoid(o).astype(o_ref.dtype)


def head(x, w2, b2, w3, b3, tile_n=512):
    # x: (N, 16); w2: (8, 16); b2: (8,); w3: (1, 8); b3: (1,)
    N, Din = x.shape
    D2 = w2.shape[0]
    tn = N if N <= tile_n else tile_n
    grid = (pl.cdiv(N, tn),)
    return pl.pallas_call(
        _head_kernel,
        out_shape=jax.ShapeDtypeStruct((N, 1), jnp.float32),
        grid=grid,
        in_specs=[
            pl.BlockSpec((tn, Din), lambda i: (i, 0)),
            pl.BlockSpec((Din, D2), lambda i: (0, 0)),
            pl.BlockSpec((1, D2), lambda i: (0, 0)),
            pl.BlockSpec((1, D2), lambda i: (0, 0)),
            pl.BlockSpec((1, 1), lambda i: (0, 0)),
        ],
        out_specs=pl.BlockSpec((tn, 1), lambda i: (i, 0)),
        compiler_params=pltpu.CompilerParams(dimension_semantics=("parallel",)),
    )(x, w2.T, b2.reshape(1, D2), w3.reshape(1, D2), b3.reshape(1, 1))


# --------------------------------------------------------------------------
# Deterministic parameter init (PyTorch-like uniform bounds, fixed PRNG key)
# --------------------------------------------------------------------------
def init_params(key, input_dim):
    def lin(k, out_d, in_d):
        k1, k2 = jax.random.split(k)
        bd = 1.0 / jnp.sqrt(in_d)
        return (jax.random.uniform(k1, (out_d, in_d), jnp.float32, -bd, bd),
                jax.random.uniform(k2, (out_d,), jnp.float32, -bd, bd))

    def gru_p(k, in_d, h):
        k1, k2, k3, k4 = jax.random.split(k, 4)
        bd = 1.0 / jnp.sqrt(h)
        return (jax.random.uniform(k1, (3 * h, in_d), jnp.float32, -bd, bd),
                jax.random.uniform(k2, (3 * h, h), jnp.float32, -bd, bd),
                jax.random.uniform(k3, (3 * h,), jnp.float32, -bd, bd),
                jax.random.uniform(k4, (3 * h,), jnp.float32, -bd, bd))

    def conv_p(k, c_out, c_in, kw):
        k1, k2 = jax.random.split(k)
        bd = 1.0 / jnp.sqrt(c_in * kw)
        return (jax.random.uniform(k1, (c_out, c_in, 1, kw), jnp.float32, -bd, bd),
                jax.random.uniform(k2, (c_out,), jnp.float32, -bd, bd))

    ks = jax.random.split(key, 8)
    return {
        "fc1": lin(ks[0], 128, input_dim),
        "gru1": gru_p(ks[1], 128, 64),
        "conv1": conv_p(ks[2], 4, 1, 13),
        "gru2": gru_p(ks[3], 64, 32),
        "conv2": conv_p(ks[4], 1, 4, 7),
        "gru3": gru_p(ks[5], 32, 16),
        "fc2": lin(ks[6], 8, 16),
        "fc3": lin(ks[7], 1, 8),
    }


# --------------------------------------------------------------------------
# Full forward pass (mirrors DGCGCGD_13_7.forward, inference mode)
# --------------------------------------------------------------------------
def forward(params, x):
    B, S, D = x.shape
    N = B * S

    # fc1: (B,S,D) -> (B,S,128)
    w, b = params["fc1"]
    h = dense(x.reshape(N, D), w.T, b)

    # gru1: (B,S,128) -> (B,S,64)
    h1 = gru_layer(h.reshape(B, S, 128), *params["gru1"])

    # conv2d1: NCHW (B,1,S,64) -> (B,4,S,64), then view to (B*4, S, 64)
    cw, cb = params["conv1"]
    c1 = conv1d_same_matmul(h1.reshape(N, 1, 64), cw, cb)        # (N, 4, 64)
    x2 = c1.reshape(B, S, 4, 64).transpose(0, 2, 1, 3).reshape(B * 4, S, 64)

    # gru2: (B*4,S,64) -> (B*4,S,32)
    h2 = gru_layer(x2, *params["gru2"])

    # conv2d2: NCHW (B,4,S,32) -> (B,1,S,32), then view to (B, S, 32)
    cw, cb = params["conv2"]
    c2_in = h2.reshape(B, 4, S, 32).transpose(0, 2, 1, 3).reshape(N, 4, 32)
    c2 = conv1d_same_matmul(c2_in, cw, cb)                       # (N, 1, 32)
    x3 = c2.reshape(B, S, 32)

    # gru3: (B,S,32) -> (B,S,16)
    h3 = gru_layer(x3, *params["gru3"])

    # Fused head: fc2 + ReLU (+ Dropout identity) + fc3 + Sigmoid
    (w2, b2) = params["fc2"]
    (w3, b3) = params["fc3"]
    o = head(h3.reshape(N, 16), w2, b2, w3, b3)
    return o.reshape(B, S, 1)


if __name__ == "__main__":
    key = jax.random.PRNGKey(0)
    kp, kx = jax.random.split(key)
    input_dim = 16
    B, S = 2, 8
    params = init_params(kp, input_dim)
    x = jax.random.normal(kx, (B, S, input_dim), jnp.float32)
    out = jax.jit(forward)(params, x)
    jax.block_until_ready(out)
    assert out.shape == (B, S, 1)
    assert bool(jnp.all((out >= 0.0) & (out <= 1.0)))
    print("KERNEL_OK")
</pallas_src>

<mosaic_0001>
module attributes {stable_mosaic.version = 11 : i64} {
  func.func @_dense_kernel(%arg0: i32, %arg1: memref<16x16xf32, #tpu.memory_space<vmem>>, %arg2: memref<16x128xf32, #tpu.memory_space<vmem>>, %arg3: memref<1x128xf32, #tpu.memory_space<vmem>>, %arg4: memref<16x128xf32, #tpu.memory_space<vmem>>) attributes {dimension_semantics = [#tpu.dimension_semantics<parallel>], iteration_bounds = array<i64: 1>, scalar_prefetch = 0 : i64, scratch_operands = 0 : i64, tpu.core_type = #tpu.core_type<tc>, window_params = [{transform_indices = @transform_0, window_bounds = array<i64: 16, 16>}, {pipeline_mode = #tpu.pipeline_mode<synchronous>, transform_indices = @transform_1, window_bounds = array<i64: 16, 128>}, {pipeline_mode = #tpu.pipeline_mode<synchronous>, transform_indices = @transform_2, window_bounds = array<i64: 1, 128>}, {transform_indices = @transform_3, window_bounds = array<i64: 16, 128>}]} {
    %c0 = arith.constant 0 : index
    %c0_0 = arith.constant 0 : index
    %0 = vector.load %arg1[%c0, %c0_0] : memref<16x16xf32, #tpu.memory_space<vmem>>, vector<16x16xf32>
    %c0_1 = arith.constant 0 : index
    %c0_2 = arith.constant 0 : index
    %1 = vector.load %arg2[%c0_1, %c0_2] : memref<16x128xf32, #tpu.memory_space<vmem>>, vector<16x128xf32>
    %cst = arith.constant dense<0.000000e+00> : vector<16x128xf32>
    %2 = tpu.matmul %0, %1, %cst {dimension_numbers = #tpu.dot_dimension_numbers<[1], [0], [0], [1], [0, 0, 1, 1], [], []>} : vector<16x16xf32>, vector<16x128xf32>, vector<16x128xf32> -> vector<16x128xf32>
    %c0_3 = arith.constant 0 : index
    %c0_4 = arith.constant 0 : index
    %3 = vector.load %arg3[%c0_3, %c0_4] : memref<1x128xf32, #tpu.memory_space<vmem>>, vector<1x128xf32>
    %4 = vector.broadcast %3 : vector<1x128xf32> to vector<16x128xf32>
    %5 = arith.addf %2, %4 : vector<16x128xf32>
    %c0_5 = arith.constant 0 : index
    %c0_6 = arith.constant 0 : index
    %6 = vector.load %arg4[%c0_5, %c0_6] : memref<16x128xf32, #tpu.memory_space<vmem>>, vector<16x128xf32>
    tpu.vector_store %arg4[%c0_5, %c0_6], %5 {strides = array<i32>} : memref<16x128xf32, #tpu.memory_space<vmem>>, vector<16x128xf32>,
    return
  }
  func.func @transform_0(%arg0: i32) -> (i32, i32) {
    %c0_i32 = arith.constant 0 : i32
    %c0_i32_0 = arith.constant 0 : i32
    return %arg0, %c0_i32 : i32, i32
  }
  func.func @transform_1(%arg0: i32) -> (i32, i32) {
    %c0_i32 = arith.constant 0 : i32
    %c0_i32_0 = arith.constant 0 : i32
    %c0_i32_1 = arith.constant 0 : i32
    return %c0_i32, %c0_i32_0 : i32, i32
  }
  func.func @transform_2(%arg0: i32) -> (i32, i32) {
    %c0_i32 = arith.constant 0 : i32
    %c0_i32_0 = arith.constant 0 : i32
    %c0_i32_1 = arith.constant 0 : i32
    return %c0_i32, %c0_i32_0 : i32, i32
  }
  func.func @transform_3(%arg0: i32) -> (i32, i32) {
    %c0_i32 = arith.constant 0 : i32
    %c0_i32_0 = arith.constant 0 : i32
    return %arg0, %c0_i32 : i32, i32
  }
}

module attributes {stable_mosaic.version = 11 : i64} {
  func.func @_gru_kernel(%arg0: i32, %arg1: memref<8x2x128xf32, #tpu.memory_space<vmem>>, %arg2: memref<128x192xf32, #tpu.memory_space<vmem>>, %arg3: memref<1x192xf32, #tpu.memory_space<vmem>>, %arg4: memref<64x192xf32, #tpu.memory_space<vmem>>, %arg5: memref<1x64xf32, #tpu.memory_space<vmem>>, %arg6: memref<8x2x64xf32, #tpu.memory_space<vmem>>, %arg7: memref<2x64xf32, #tpu.memory_space<vmem>>) attributes {dimension_semantics = [#tpu.dimension_semantics<parallel>], iteration_bounds = array<i64: 1>, scalar_prefetch = 0 : i64, scratch_operands = 1 : i64, tpu.core_type = #tpu.core_type<tc>, window_params = [{transform_indices = @transform_0, window_bounds = array<i64: 8, 2, 128>}, {pipeline_mode = #tpu.pipeline_mode<synchronous>, transform_indices = @transform_1, window_bounds = array<i64: 128, 192>}, {pipeline_mode = #tpu.pipeline_mode<synchronous>, transform_indices = @transform_2, window_bounds = array<i64: 1, 192>}, {pipeline_mode = #tpu.pipeline_mode<synchronous>, transform_indices = @transform_3, window_bounds = array<i64: 64, 192>}, {pipeline_mode = #tpu.pipeline_mode<synchronous>, transform_indices = @transform_4, window_bounds = array<i64: 1, 64>}, {transform_indices = @transform_5, window_bounds = array<i64: 8, 2, 64>}]} {
    %cst = arith.constant 0.000000e+00 : f32
    %0 = vector.broadcast %cst : f32 to vector<2x64xf32>
    %c0 = arith.constant 0 : index
    %c0_0 = arith.constant 0 : index
    %1 = vector.load %arg7[%c0, %c0_0] : memref<2x64xf32, #tpu.memory_space<vmem>>, vector<2x64xf32>
    tpu.vector_store %arg7[%c0, %c0_0], %0 {strides = array<i32>} : memref<2x64xf32, #tpu.memory_space<vmem>>, vector<2x64xf32>,
    %c0_i32 = arith.constant 0 : i32
    %c8_i32 = arith.constant 8 : i32
    %2 = arith.addi %c0_i32, %c8_i32 : i32
    %c1_i32 = arith.constant 1 : i32
    scf.for %arg8 = %c0_i32 to %2 step %c1_i32  : i32 {
      %3 = arith.index_cast %arg8 : i32 to index
      %c0_2 = arith.constant 0 : index
      %c0_3 = arith.constant 0 : index
      %4 = vector.load %arg1[%3, %c0_2, %c0_3] : memref<8x2x128xf32, #tpu.memory_space<vmem>>, vector<1x2x128xf32>
      %5 = vector.shape_cast %4 : vector<1x2x128xf32> to vector<2x128xf32>
      %c0_4 = arith.constant 0 : index
      %c0_5 = arith.constant 0 : index
      %6 = vector.load %arg2[%c0_4, %c0_5] : memref<128x192xf32, #tpu.memory_space<vmem>>, vector<128x192xf32>
      %cst_6 = arith.constant dense<0.000000e+00> : vector<2x192xf32>
      %7 = tpu.matmul %5, %6, %cst_6 {dimension_numbers = #tpu.dot_dimension_numbers<[1], [0], [0], [1], [0, 0, 1, 1], [], []>} : vector<2x128xf32>, vector<128x192xf32>, vector<2x192xf32> -> vector<2x192xf32>
      %c0_7 = arith.constant 0 : index
      %c0_8 = arith.constant 0 : index
      %8 = vector.load %arg3[%c0_7, %c0_8] : memref<1x192xf32, #tpu.memory_space<vmem>>, vector<1x192xf32>
      %9 = vector.broadcast %8 : vector<1x192xf32> to vector<2x192xf32>
      %10 = arith.addf %7, %9 : vector<2x192xf32>
      %c0_9 = arith.constant 0 : index
      %c0_10 = arith.constant 0 : index
      %11 = vector.load %arg7[%c0_9, %c0_10] : memref<2x64xf32, #tpu.memory_space<vmem>>, vector<2x64xf32>
      %c0_11 = arith.constant 0 : index
      %c0_12 = arith.constant 0 : index
      %12 = vector.load %arg4[%c0_11, %c0_12] : memref<64x192xf32, #tpu.memory_space<vmem>>, vector<64x192xf32>
      %cst_13 = arith.constant dense<0.000000e+00> : vector<2x192xf32>
      %13 = tpu.matmul %11, %12, %cst_13 {dimension_numbers = #tpu.dot_dimension_numbers<[1], [0], [0], [1], [0, 0, 1, 1], [], []>} : vector<2x64xf32>, vector<64x192xf32>, vector<2x192xf32> -> vector<2x192xf32>
      %14 = vector.extract_strided_slice %10 {offsets = [0, 0], sizes = [2, 64], strides = [1, 1]} : vector<2x192xf32> to vector<2x64xf32>
      %15 = vector.extract_strided_slice %13 {offsets = [0, 0], sizes = [2, 64], strides = [1, 1]} : vector<2x192xf32> to vector<2x64xf32>
      %16 = arith.addf %14, %15 : vector<2x64xf32>
      %17 = arith.negf %16 : vector<2x64xf32>
      %18 = math.exp %17 : vector<2x64xf32>
      %cst_14 = arith.constant 1.000000e+00 : f32
      %19 = vector.broadcast %cst_14 : f32 to vector<2x64xf32>
      %20 = arith.addf %19, %18 : vector<2x64xf32>
      %21 = arith.divf %19, %20 : vector<2x64xf32>
      %22 = vector.extract_strided_slice %10 {offsets = [0, 64], sizes = [2, 64], strides = [1, 1]} : vector<2x192xf32> to vector<2x64xf32>
      %23 = vector.extract_strided_slice %13 {offsets = [0, 64], sizes = [2, 64], strides = [1, 1]} : vector<2x192xf32> to vector<2x64xf32>
      %24 = arith.addf %22, %23 : vector<2x64xf32>
      %25 = arith.negf %24 : vector<2x64xf32>
      %26 = math.exp %25 : vector<2x64xf32>
      %cst_15 = arith.constant 1.000000e+00 : f32
      %27 = vector.broadcast %cst_15 : f32 to vector<2x64xf32>
      %28 = arith.addf %27, %26 : vector<2x64xf32>
      %29 = arith.divf %27, %28 : vector<2x64xf32>
      %30 = vector.extract_strided_slice %10 {offsets = [0, 128], sizes = [2, 64], strides = [1, 1]} : vector<2x192xf32> to vector<2x64xf32>
      %31 = vector.extract_strided_slice %13 {offsets = [0, 128], sizes = [2, 64], strides = [1, 1]} : vector<2x192xf32> to vector<2x64xf32>
      %c0_16 = arith.constant 0 : index
      %c0_17 = arith.constant 0 : index
      %32 = vector.load %arg5[%c0_16, %c0_17] : memref<1x64xf32, #tpu.memory_space<vmem>>, vector<1x64xf32>
      %33 = vector.broadcast %32 : vector<1x64xf32> to vector<2x64xf32>
      %34 = arith.addf %31, %33 : vector<2x64xf32>
      %35 = arith.mulf %21, %34 : vector<2x64xf32>
      %36 = arith.addf %30, %35 : vector<2x64xf32>
      %37 = math.tanh %36 : vector<2x64xf32>
      %cst_18 = arith.constant 1.000000e+00 : f32
      %38 = vector.broadcast %cst_18 : f32 to vector<2x64xf32>
      %39 = arith.subf %38, %29 : vector<2x64xf32>
      %40 = arith.mulf %39, %37 : vector<2x64xf32>
      %41 = arith.mulf %29, %11 : vector<2x64xf32>
      %42 = arith.addf %40, %41 : vector<2x64xf32>
      %c0_19 = arith.constant 0 : index
      %c0_20 = arith.constant 0 : index
      %43 = vector.load %arg7[%c0_19, %c0_20] : memref<2x64xf32, #tpu.memory_space<vmem>>, vector<2x64xf32>
      tpu.vector_store %arg7[%c0_19, %c0_20], %42 {strides = array<i32>} : memref<2x64xf32, #tpu.memory_space<vmem>>, vector<2x64xf32>,
      %44 = arith.index_cast %arg8 : i32 to index
      %c0_21 = arith.constant 0 : index
      %c0_22 = arith.constant 0 : index
      %45 = vector.load %arg6[%44, %c0_21, %c0_22] : memref<8x2x64xf32, #tpu.memory_space<vmem>>, vector<1x2x64xf32>
      %46 = vector.shape_cast %45 : vector<1x2x64xf32> to vector<2x64xf32>
      %47 = vector.shape_cast %42 : vector<2x64xf32> to vector<1x2x64xf32>
      tpu.vector_store %arg6[%44, %c0_21, %c0_22], %47 {strides = array<i32>} : memref<8x2x64xf32, #tpu.memory_space<vmem>>, vector<1x2x64xf32>,
    }
    %c8_i32_1 = arith.constant 8 : i32
    return
  }
  func.func @transform_0(%arg0: i32) -> (i32, i32, i32) {
    %c0_i32 = arith.constant 0 : i32
    %c0_i32_0 = arith.constant 0 : i32
    %c0_i32_1 = arith.constant 0 : i32
    return %c0_i32, %arg0, %c0_i32_0 : i32, i32, i32
  }
  func.func @transform_1(%arg0: i32) -> (i32, i32) {
    %c0_i32 = arith.constant 0 : i32
    %c0_i32_0 = arith.constant 0 : i32
    %c0_i32_1 = arith.constant 0 : i32
    return %c0_i32, %c0_i32_0 : i32, i32
  }
  func.func @transform_2(%arg0: i32) -> (i32, i32) {
    %c0_i32 = arith.constant 0 : i32
    %c0_i32_0 = arith.constant 0 : i32
    %c0_i32_1 = arith.constant 0 : i32
    return %c0_i32, %c0_i32_0 : i32, i32
  }
  func.func @transform_3(%arg0: i32) -> (i32, i32) {
    %c0_i32 = arith.constant 0 : i32
    %c0_i32_0 = arith.constant 0 : i32
    %c0_i32_1 = arith.constant 0 : i32
    return %c0_i32, %c0_i32_0 : i32, i32
  }
  func.func @transform_4(%arg0: i32) -> (i32, i32) {
    %c0_i32 = arith.constant 0 : i32
    %c0_i32_0 = arith.constant 0 : i32
    %c0_i32_1 = arith.constant 0 : i32
    return %c0_i32, %c0_i32_0 : i32, i32
  }
  func.func @transform_5(%arg0: i32) -> (i32, i32, i32) {
    %c0_i32 = arith.constant 0 : i32
    %c0_i32_0 = arith.constant 0 : i32
    %c0_i32_1 = arith.constant 0 : i32
    return %c0_i32, %arg0, %c0_i32_0 : i32, i32, i32
  }
}

module attributes {stable_mosaic.version = 11 : i64} {
  func.func @_dense_kernel(%arg0: i32, %arg1: memref<16x76xf32, #tpu.memory_space<vmem>>, %arg2: memref<76x256xf32, #tpu.memory_space<vmem>>, %arg3: memref<1x256xf32, #tpu.memory_space<vmem>>, %arg4: memref<16x256xf32, #tpu.memory_space<vmem>>) attributes {dimension_semantics = [#tpu.dimension_semantics<parallel>], iteration_bounds = array<i64: 1>, scalar_prefetch = 0 : i64, scratch_operands = 0 : i64, tpu.core_type = #tpu.core_type<tc>, window_params = [{transform_indices = @transform_0, window_bounds = array<i64: 16, 76>}, {pipeline_mode = #tpu.pipeline_mode<synchronous>, transform_indices = @transform_1, window_bounds = array<i64: 76, 256>}, {pipeline_mode = #tpu.pipeline_mode<synchronous>, transform_indices = @transform_2, window_bounds = array<i64: 1, 256>}, {transform_indices = @transform_3, window_bounds = array<i64: 16, 256>}]} {
    %c0 = arith.constant 0 : index
    %c0_0 = arith.constant 0 : index
    %0 = vector.load %arg1[%c0, %c0_0] : memref<16x76xf32, #tpu.memory_space<vmem>>, vector<16x76xf32>
    %c0_1 = arith.constant 0 : index
    %c0_2 = arith.constant 0 : index
    %1 = vector.load %arg2[%c0_1, %c0_2] : memref<76x256xf32, #tpu.memory_space<vmem>>, vector<76x256xf32>
    %cst = arith.constant dense<0.000000e+00> : vector<16x256xf32>
    %2 = tpu.matmul %0, %1, %cst {dimension_numbers = #tpu.dot_dimension_numbers<[1], [0], [0], [1], [0, 0, 1, 1], [], []>} : vector<16x76xf32>, vector<76x256xf32>, vector<16x256xf32> -> vector<16x256xf32>
    %c0_3 = arith.constant 0 : index
    %c0_4 = arith.constant 0 : index
    %3 = vector.load %arg3[%c0_3, %c0_4] : memref<1x256xf32, #tpu.memory_space<vmem>>, vector<1x256xf32>
    %4 = vector.broadcast %3 : vector<1x256xf32> to vector<16x256xf32>
    %5 = arith.addf %2, %4 : vector<16x256xf32>
    %c0_5 = arith.constant 0 : index
    %c0_6 = arith.constant 0 : index
    %6 = vector.load %arg4[%c0_5, %c0_6] : memref<16x256xf32, #tpu.memory_space<vmem>>, vector<16x256xf32>
    tpu.vector_store %arg4[%c0_5, %c0_6], %5 {strides = array<i32>} : memref<16x256xf32, #tpu.memory_space<vmem>>, vector<16x256xf32>,
    return
  }
  func.func @transform_0(%arg0: i32) -> (i32, i32) {
    %c0_i32 = arith.constant 0 : i32
    %c0_i32_0 = arith.constant 0 : i32
    return %arg0, %c0_i32 : i32, i32
  }
  func.func @transform_1(%arg0: i32) -> (i32, i32) {
    %c0_i32 = arith.constant 0 : i32
    %c0_i32_0 = arith.constant 0 : i32
    %c0_i32_1 = arith.constant 0 : i32
    return %c0_i32, %c0_i32_0 : i32, i32
  }
  func.func @transform_2(%arg0: i32) -> (i32, i32) {
    %c0_i32 = arith.constant 0 : i32
    %c0_i32_0 = arith.constant 0 : i32
    %c0_i32_1 = arith.constant 0 : i32
    return %c0_i32, %c0_i32_0 : i32, i32
  }
  func.func @transform_3(%arg0: i32) -> (i32, i32) {
    %c0_i32 = arith.constant 0 : i32
    %c0_i32_0 = arith.constant 0 : i32
    return %arg0, %c0_i32 : i32, i32
  }
}

module attributes {stable_mosaic.version = 11 : i64} {
  func.func @_gru_kernel(%arg0: i32, %arg1: memref<8x8x64xf32, #tpu.memory_space<vmem>>, %arg2: memref<64x96xf32, #tpu.memory_space<vmem>>, %arg3: memref<1x96xf32, #tpu.memory_space<vmem>>, %arg4: memref<32x96xf32, #tpu.memory_space<vmem>>, %arg5: memref<1x32xf32, #tpu.memory_space<vmem>>, %arg6: memref<8x8x32xf32, #tpu.memory_space<vmem>>, %arg7: memref<8x32xf32, #tpu.memory_space<vmem>>) attributes {dimension_semantics = [#tpu.dimension_semantics<parallel>], iteration_bounds = array<i64: 1>, scalar_prefetch = 0 : i64, scratch_operands = 1 : i64, tpu.core_type = #tpu.core_type<tc>, window_params = [{transform_indices = @transform_0, window_bounds = array<i64: 8, 8, 64>}, {pipeline_mode = #tpu.pipeline_mode<synchronous>, transform_indices = @transform_1, window_bounds = array<i64: 64, 96>}, {pipeline_mode = #tpu.pipeline_mode<synchronous>, transform_indices = @transform_2, window_bounds = array<i64: 1, 96>}, {pipeline_mode = #tpu.pipeline_mode<synchronous>, transform_indices = @transform_3, window_bounds = array<i64: 32, 96>}, {pipeline_mode = #tpu.pipeline_mode<synchronous>, transform_indices = @transform_4, window_bounds = array<i64: 1, 32>}, {transform_indices = @transform_5, window_bounds = array<i64: 8, 8, 32>}]} {
    %cst = arith.constant 0.000000e+00 : f32
    %0 = vector.broadcast %cst : f32 to vector<8x32xf32>
    %c0 = arith.constant 0 : index
    %c0_0 = arith.constant 0 : index
    %1 = vector.load %arg7[%c0, %c0_0] : memref<8x32xf32, #tpu.memory_space<vmem>>, vector<8x32xf32>
    tpu.vector_store %arg7[%c0, %c0_0], %0 {strides = array<i32>} : memref<8x32xf32, #tpu.memory_space<vmem>>, vector<8x32xf32>,
    %c0_i32 = arith.constant 0 : i32
    %c8_i32 = arith.constant 8 : i32
    %2 = arith.addi %c0_i32, %c8_i32 : i32
    %c1_i32 = arith.constant 1 : i32
    scf.for %arg8 = %c0_i32 to %2 step %c1_i32  : i32 {
      %3 = arith.index_cast %arg8 : i32 to index
      %c0_2 = arith.constant 0 : index
      %c0_3 = arith.constant 0 : index
      %4 = vector.load %arg1[%3, %c0_2, %c0_3] : memref<8x8x64xf32, #tpu.memory_space<vmem>>, vector<1x8x64xf32>
      %5 = vector.shape_cast %4 : vector<1x8x64xf32> to vector<8x64xf32>
      %c0_4 = arith.constant 0 : index
      %c0_5 = arith.constant 0 : index
      %6 = vector.load %arg2[%c0_4, %c0_5] : memref<64x96xf32, #tpu.memory_space<vmem>>, vector<64x96xf32>
      %cst_6 = arith.constant dense<0.000000e+00> : vector<8x96xf32>
      %7 = tpu.matmul %5, %6, %cst_6 {dimension_numbers = #tpu.dot_dimension_numbers<[1], [0], [0], [1], [0, 0, 1, 1], [], []>} : vector<8x64xf32>, vector<64x96xf32>, vector<8x96xf32> -> vector<8x96xf32>
      %c0_7 = arith.constant 0 : index
      %c0_8 = arith.constant 0 : index
      %8 = vector.load %arg3[%c0_7, %c0_8] : memref<1x96xf32, #tpu.memory_space<vmem>>, vector<1x96xf32>
      %9 = vector.broadcast %8 : vector<1x96xf32> to vector<8x96xf32>
      %10 = arith.addf %7, %9 : vector<8x96xf32>
      %c0_9 = arith.constant 0 : index
      %c0_10 = arith.constant 0 : index
      %11 = vector.load %arg7[%c0_9, %c0_10] : memref<8x32xf32, #tpu.memory_space<vmem>>, vector<8x32xf32>
      %c0_11 = arith.constant 0 : index
      %c0_12 = arith.constant 0 : index
      %12 = vector.load %arg4[%c0_11, %c0_12] : memref<32x96xf32, #tpu.memory_space<vmem>>, vector<32x96xf32>
      %cst_13 = arith.constant dense<0.000000e+00> : vector<8x96xf32>
      %13 = tpu.matmul %11, %12, %cst_13 {dimension_numbers = #tpu.dot_dimension_numbers<[1], [0], [0], [1], [0, 0, 1, 1], [], []>} : vector<8x32xf32>, vector<32x96xf32>, vector<8x96xf32> -> vector<8x96xf32>
      %14 = vector.extract_strided_slice %10 {offsets = [0, 0], sizes = [8, 32], strides = [1, 1]} : vector<8x96xf32> to vector<8x32xf32>
      %15 = vector.extract_strided_slice %13 {offsets = [0, 0], sizes = [8, 32], strides = [1, 1]} : vector<8x96xf32> to vector<8x32xf32>
      %16 = arith.addf %14, %15 : vector<8x32xf32>
      %17 = arith.negf %16 : vector<8x32xf32>
      %18 = math.exp %17 : vector<8x32xf32>
      %cst_14 = arith.constant 1.000000e+00 : f32
      %19 = vector.broadcast %cst_14 : f32 to vector<8x32xf32>
      %20 = arith.addf %19, %18 : vector<8x32xf32>
      %21 = arith.divf %19, %20 : vector<8x32xf32>
      %22 = vector.extract_strided_slice %10 {offsets = [0, 32], sizes = [8, 32], strides = [1, 1]} : vector<8x96xf32> to vector<8x32xf32>
      %23 = vector.extract_strided_slice %13 {offsets = [0, 32], sizes = [8, 32], strides = [1, 1]} : vector<8x96xf32> to vector<8x32xf32>
      %24 = arith.addf %22, %23 : vector<8x32xf32>
      %25 = arith.negf %24 : vector<8x32xf32>
      %26 = math.exp %25 : vector<8x32xf32>
      %cst_15 = arith.constant 1.000000e+00 : f32
      %27 = vector.broadcast %cst_15 : f32 to vector<8x32xf32>
      %28 = arith.addf %27, %26 : vector<8x32xf32>
      %29 = arith.divf %27, %28 : vector<8x32xf32>
      %30 = vector.extract_strided_slice %10 {offsets = [0, 64], sizes = [8, 32], strides = [1, 1]} : vector<8x96xf32> to vector<8x32xf32>
      %31 = vector.extract_strided_slice %13 {offsets = [0, 64], sizes = [8, 32], strides = [1, 1]} : vector<8x96xf32> to vector<8x32xf32>
      %c0_16 = arith.constant 0 : index
      %c0_17 = arith.constant 0 : index
      %32 = vector.load %arg5[%c0_16, %c0_17] : memref<1x32xf32, #tpu.memory_space<vmem>>, vector<1x32xf32>
      %33 = vector.broadcast %32 : vector<1x32xf32> to vector<8x32xf32>
      %34 = arith.addf %31, %33 : vector<8x32xf32>
      %35 = arith.mulf %21, %34 : vector<8x32xf32>
      %36 = arith.addf %30, %35 : vector<8x32xf32>
      %37 = math.tanh %36 : vector<8x32xf32>
      %cst_18 = arith.constant 1.000000e+00 : f32
      %38 = vector.broadcast %cst_18 : f32 to vector<8x32xf32>
      %39 = arith.subf %38, %29 : vector<8x32xf32>
      %40 = arith.mulf %39, %37 : vector<8x32xf32>
      %41 = arith.mulf %29, %11 : vector<8x32xf32>
      %42 = arith.addf %40, %41 : vector<8x32xf32>
      %c0_19 = arith.constant 0 : index
      %c0_20 = arith.constant 0 : index
      %43 = vector.load %arg7[%c0_19, %c0_20] : memref<8x32xf32, #tpu.memory_space<vmem>>, vector<8x32xf32>
      tpu.vector_store %arg7[%c0_19, %c0_20], %42 {strides = array<i32>} : memref<8x32xf32, #tpu.memory_space<vmem>>, vector<8x32xf32>,
      %44 = arith.index_cast %arg8 : i32 to index
      %c0_21 = arith.constant 0 : index
      %c0_22 = arith.constant 0 : index
      %45 = vector.load %arg6[%44, %c0_21, %c0_22] : memref<8x8x32xf32, #tpu.memory_space<vmem>>, vector<1x8x32xf32>
      %46 = vector.shape_cast %45 : vector<1x8x32xf32> to vector<8x32xf32>
      %47 = vector.shape_cast %42 : vector<8x32xf32> to vector<1x8x32xf32>
      tpu.vector_store %arg6[%44, %c0_21, %c0_22], %47 {strides = array<i32>} : memref<8x8x32xf32, #tpu.memory_space<vmem>>, vector<1x8x32xf32>,
    }
    %c8_i32_1 = arith.constant 8 : i32
    return
  }
  func.func @transform_0(%arg0: i32) -> (i32, i32, i32) {
    %c0_i32 = arith.constant 0 : i32
    %c0_i32_0 = arith.constant 0 : i32
    %c0_i32_1 = arith.constant 0 : i32
    return %c0_i32, %arg0, %c0_i32_0 : i32, i32, i32
  }
  func.func @transform_1(%arg0: i32) -> (i32, i32) {
    %c0_i32 = arith.constant 0 : i32
    %c0_i32_0 = arith.constant 0 : i32
    %c0_i32_1 = arith.constant 0 : i32
    return %c0_i32, %c0_i32_0 : i32, i32
  }
  func.func @transform_2(%arg0: i32) -> (i32, i32) {
    %c0_i32 = arith.constant 0 : i32
    %c0_i32_0 = arith.constant 0 : i32
    %c0_i32_1 = arith.constant 0 : i32
    return %c0_i32, %c0_i32_0 : i32, i32
  }
  func.func @transform_3(%arg0: i32) -> (i32, i32) {
    %c0_i32 = arith.constant 0 : i32
    %c0_i32_0 = arith.constant 0 : i32
    %c0_i32_1 = arith.constant 0 : i32
    return %c0_i32, %c0_i32_0 : i32, i32
  }
  func.func @transform_4(%arg0: i32) -> (i32, i32) {
    %c0_i32 = arith.constant 0 : i32
    %c0_i32_0 = arith.constant 0 : i32
    %c0_i32_1 = arith.constant 0 : i32
    return %c0_i32, %c0_i32_0 : i32, i32
  }
  func.func @transform_5(%arg0: i32) -> (i32, i32, i32) {
    %c0_i32 = arith.constant 0 : i32
    %c0_i32_0 = arith.constant 0 : i32
    %c0_i32_1 = arith.constant 0 : i32
    return %c0_i32, %arg0, %c0_i32_0 : i32, i32, i32
  }
}

module attributes {stable_mosaic.version = 11 : i64} {
  func.func @_dense_kernel(%arg0: i32, %arg1: memref<16x152xf32, #tpu.memory_space<vmem>>, %arg2: memref<152x32xf32, #tpu.memory_space<vmem>>, %arg3: memref<1x32xf32, #tpu.memory_space<vmem>>, %arg4: memref<16x32xf32, #tpu.memory_space<vmem>>) attributes {dimension_semantics = [#tpu.dimension_semantics<parallel>], iteration_bounds = array<i64: 1>, scalar_prefetch = 0 : i64, scratch_operands = 0 : i64, tpu.core_type = #tpu.core_type<tc>, window_params = [{transform_indices = @transform_0, window_bounds = array<i64: 16, 152>}, {pipeline_mode = #tpu.pipeline_mode<synchronous>, transform_indices = @transform_1, window_bounds = array<i64: 152, 32>}, {pipeline_mode = #tpu.pipeline_mode<synchronous>, transform_indices = @transform_2, window_bounds = array<i64: 1, 32>}, {transform_indices = @transform_3, window_bounds = array<i64: 16, 32>}]} {
    %c0 = arith.constant 0 : index
    %c0_0 = arith.constant 0 : index
    %0 = vector.load %arg1[%c0, %c0_0] : memref<16x152xf32, #tpu.memory_space<vmem>>, vector<16x152xf32>
    %c0_1 = arith.constant 0 : index
    %c0_2 = arith.constant 0 : index
    %1 = vector.load %arg2[%c0_1, %c0_2] : memref<152x32xf32, #tpu.memory_space<vmem>>, vector<152x32xf32>
    %cst = arith.constant dense<0.000000e+00> : vector<16x32xf32>
    %2 = tpu.matmul %0, %1, %cst {dimension_numbers = #tpu.dot_dimension_numbers<[1], [0], [0], [1], [0, 0, 1, 1], [], []>} : vector<16x152xf32>, vector<152x32xf32>, vector<16x32xf32> -> vector<16x32xf32>
    %c0_3 = arith.constant 0 : index
    %c0_4 = arith.constant 0 : index
    %3 = vector.load %arg3[%c0_3, %c0_4] : memref<1x32xf32, #tpu.memory_space<vmem>>, vector<1x32xf32>
    %4 = vector.broadcast %3 : vector<1x32xf32> to vector<16x32xf32>
    %5 = arith.addf %2, %4 : vector<16x32xf32>
    %c0_5 = arith.constant 0 : index
    %c0_6 = arith.constant 0 : index
    %6 = vector.load %arg4[%c0_5, %c0_6] : memref<16x32xf32, #tpu.memory_space<vmem>>, vector<16x32xf32>
    tpu.vector_store %arg4[%c0_5, %c0_6], %5 {strides = array<i32>} : memref<16x32xf32, #tpu.memory_space<vmem>>, vector<16x32xf32>,
    return
  }
  func.func @transform_0(%arg0: i32) -> (i32, i32) {
    %c0_i32 = arith.constant 0 : i32
    %c0_i32_0 = arith.constant 0 : i32
    return %arg0, %c0_i32 : i32, i32
  }
  func.func @transform_1(%arg0: i32) -> (i32, i32) {
    %c0_i32 = arith.constant 0 : i32
    %c0_i32_0 = arith.constant 0 : i32
    %c0_i32_1 = arith.constant 0 : i32
    return %c0_i32, %c0_i32_0 : i32, i32
  }
  func.func @transform_2(%arg0: i32) -> (i32, i32) {
    %c0_i32 = arith.constant 0 : i32
    %c0_i32_0 = arith.constant 0 : i32
    %c0_i32_1 = arith.constant 0 : i32
    return %c0_i32, %c0_i32_0 : i32, i32
  }
  func.func @transform_3(%arg0: i32) -> (i32, i32) {
    %c0_i32 = arith.constant 0 : i32
    %c0_i32_0 = arith.constant 0 : i32
    return %arg0, %c0_i32 : i32, i32
  }
}

module attributes {stable_mosaic.version = 11 : i64} {
  func.func @_gru_kernel(%arg0: i32, %arg1: memref<8x2x32xf32, #tpu.memory_space<vmem>>, %arg2: memref<32x48xf32, #tpu.memory_space<vmem>>, %arg3: memref<1x48xf32, #tpu.memory_space<vmem>>, %arg4: memref<16x48xf32, #tpu.memory_space<vmem>>, %arg5: memref<1x16xf32, #tpu.memory_space<vmem>>, %arg6: memref<8x2x16xf32, #tpu.memory_space<vmem>>, %arg7: memref<2x16xf32, #tpu.memory_space<vmem>>) attributes {dimension_semantics = [#tpu.dimension_semantics<parallel>], iteration_bounds = array<i64: 1>, scalar_prefetch = 0 : i64, scratch_operands = 1 : i64, tpu.core_type = #tpu.core_type<tc>, window_params = [{transform_indices = @transform_0, window_bounds = array<i64: 8, 2, 32>}, {pipeline_mode = #tpu.pipeline_mode<synchronous>, transform_indices = @transform_1, window_bounds = array<i64: 32, 48>}, {pipeline_mode = #tpu.pipeline_mode<synchronous>, transform_indices = @transform_2, window_bounds = array<i64: 1, 48>}, {pipeline_mode = #tpu.pipeline_mode<synchronous>, transform_indices = @transform_3, window_bounds = array<i64: 16, 48>}, {pipeline_mode = #tpu.pipeline_mode<synchronous>, transform_indices = @transform_4, window_bounds = array<i64: 1, 16>}, {transform_indices = @transform_5, window_bounds = array<i64: 8, 2, 16>}]} {
    %cst = arith.constant 0.000000e+00 : f32
    %0 = vector.broadcast %cst : f32 to vector<2x16xf32>
    %c0 = arith.constant 0 : index
    %c0_0 = arith.constant 0 : index
    %1 = vector.load %arg7[%c0, %c0_0] : memref<2x16xf32, #tpu.memory_space<vmem>>, vector<2x16xf32>
    tpu.vector_store %arg7[%c0, %c0_0], %0 {strides = array<i32>} : memref<2x16xf32, #tpu.memory_space<vmem>>, vector<2x16xf32>,
    %c0_i32 = arith.constant 0 : i32
    %c8_i32 = arith.constant 8 : i32
    %2 = arith.addi %c0_i32, %c8_i32 : i32
    %c1_i32 = arith.constant 1 : i32
    scf.for %arg8 = %c0_i32 to %2 step %c1_i32  : i32 {
      %3 = arith.index_cast %arg8 : i32 to index
      %c0_2 = arith.constant 0 : index
      %c0_3 = arith.constant 0 : index
      %4 = vector.load %arg1[%3, %c0_2, %c0_3] : memref<8x2x32xf32, #tpu.memory_space<vmem>>, vector<1x2x32xf32>
      %5 = vector.shape_cast %4 : vector<1x2x32xf32> to vector<2x32xf32>
      %c0_4 = arith.constant 0 : index
      %c0_5 = arith.constant 0 : index
      %6 = vector.load %arg2[%c0_4, %c0_5] : memref<32x48xf32, #tpu.memory_space<vmem>>, vector<32x48xf32>
      %cst_6 = arith.constant dense<0.000000e+00> : vector<2x48xf32>
      %7 = tpu.matmul %5, %6, %cst_6 {dimension_numbers = #tpu.dot_dimension_numbers<[1], [0], [0], [1], [0, 0, 1, 1], [], []>} : vector<2x32xf32>, vector<32x48xf32>, vector<2x48xf32> -> vector<2x48xf32>
      %c0_7 = arith.constant 0 : index
      %c0_8 = arith.constant 0 : index
      %8 = vector.load %arg3[%c0_7, %c0_8] : memref<1x48xf32, #tpu.memory_space<vmem>>, vector<1x48xf32>
      %9 = vector.broadcast %8 : vector<1x48xf32> to vector<2x48xf32>
      %10 = arith.addf %7, %9 : vector<2x48xf32>
      %c0_9 = arith.constant 0 : index
      %c0_10 = arith.constant 0 : index
      %11 = vector.load %arg7[%c0_9, %c0_10] : memref<2x16xf32, #tpu.memory_space<vmem>>, vector<2x16xf32>
      %c0_11 = arith.constant 0 : index
      %c0_12 = arith.constant 0 : index
      %12 = vector.load %arg4[%c0_11, %c0_12] : memref<16x48xf32, #tpu.memory_space<vmem>>, vector<16x48xf32>
      %cst_13 = arith.constant dense<0.000000e+00> : vector<2x48xf32>
      %13 = tpu.matmul %11, %12, %cst_13 {dimension_numbers = #tpu.dot_dimension_numbers<[1], [0], [0], [1], [0, 0, 1, 1], [], []>} : vector<2x16xf32>, vector<16x48xf32>, vector<2x48xf32> -> vector<2x48xf32>
      %14 = vector.extract_strided_slice %10 {offsets = [0, 0], sizes = [2, 16], strides = [1, 1]} : vector<2x48xf32> to vector<2x16xf32>
      %15 = vector.extract_strided_slice %13 {offsets = [0, 0], sizes = [2, 16], strides = [1, 1]} : vector<2x48xf32> to vector<2x16xf32>
      %16 = arith.addf %14, %15 : vector<2x16xf32>
      %17 = arith.negf %16 : vector<2x16xf32>
      %18 = math.exp %17 : vector<2x16xf32>
      %cst_14 = arith.constant 1.000000e+00 : f32
      %19 = vector.broadcast %cst_14 : f32 to vector<2x16xf32>
      %20 = arith.addf %19, %18 : vector<2x16xf32>
      %21 = arith.divf %19, %20 : vector<2x16xf32>
      %22 = vector.extract_strided_slice %10 {offsets = [0, 16], sizes = [2, 16], strides = [1, 1]} : vector<2x48xf32> to vector<2x16xf32>
      %23 = vector.extract_strided_slice %13 {offsets = [0, 16], sizes = [2, 16], strides = [1, 1]} : vector<2x48xf32> to vector<2x16xf32>
      %24 = arith.addf %22, %23 : vector<2x16xf32>
      %25 = arith.negf %24 : vector<2x16xf32>
      %26 = math.exp %25 : vector<2x16xf32>
      %cst_15 = arith.constant 1.000000e+00 : f32
      %27 = vector.broadcast %cst_15 : f32 to vector<2x16xf32>
      %28 = arith.addf %27, %26 : vector<2x16xf32>
      %29 = arith.divf %27, %28 : vector<2x16xf32>
      %30 = vector.extract_strided_slice %10 {offsets = [0, 32], sizes = [2, 16], strides = [1, 1]} : vector<2x48xf32> to vector<2x16xf32>
      %31 = vector.extract_strided_slice %13 {offsets = [0, 32], sizes = [2, 16], strides = [1, 1]} : vector<2x48xf32> to vector<2x16xf32>
      %c0_16 = arith.constant 0 : index
      %c0_17 = arith.constant 0 : index
      %32 = vector.load %arg5[%c0_16, %c0_17] : memref<1x16xf32, #tpu.memory_space<vmem>>, vector<1x16xf32>
      %33 = vector.broadcast %32 : vector<1x16xf32> to vector<2x16xf32>
      %34 = arith.addf %31, %33 : vector<2x16xf32>
      %35 = arith.mulf %21, %34 : vector<2x16xf32>
      %36 = arith.addf %30, %35 : vector<2x16xf32>
      %37 = math.tanh %36 : vector<2x16xf32>
      %cst_18 = arith.constant 1.000000e+00 : f32
      %38 = vector.broadcast %cst_18 : f32 to vector<2x16xf32>
      %39 = arith.subf %38, %29 : vector<2x16xf32>
      %40 = arith.mulf %39, %37 : vector<2x16xf32>
      %41 = arith.mulf %29, %11 : vector<2x16xf32>
      %42 = arith.addf %40, %41 : vector<2x16xf32>
      %c0_19 = arith.constant 0 : index
      %c0_20 = arith.constant 0 : index
      %43 = vector.load %arg7[%c0_19, %c0_20] : memref<2x16xf32, #tpu.memory_space<vmem>>, vector<2x16xf32>
      tpu.vector_store %arg7[%c0_19, %c0_20], %42 {strides = array<i32>} : memref<2x16xf32, #tpu.memory_space<vmem>>, vector<2x16xf32>,
      %44 = arith.index_cast %arg8 : i32 to index
      %c0_21 = arith.constant 0 : index
      %c0_22 = arith.constant 0 : index
      %45 = vector.load %arg6[%44, %c0_21, %c0_22] : memref<8x2x16xf32, #tpu.memory_space<vmem>>, vector<1x2x16xf32>
      %46 = vector.shape_cast %45 : vector<1x2x16xf32> to vector<2x16xf32>
      %47 = vector.shape_cast %42 : vector<2x16xf32> to vector<1x2x16xf32>
      tpu.vector_store %arg6[%44, %c0_21, %c0_22], %47 {strides = array<i32>} : memref<8x2x16xf32, #tpu.memory_space<vmem>>, vector<1x2x16xf32>,
    }
    %c8_i32_1 = arith.constant 8 : i32
    return
  }
  func.func @transform_0(%arg0: i32) -> (i32, i32, i32) {
    %c0_i32 = arith.constant 0 : i32
    %c0_i32_0 = arith.constant 0 : i32
    %c0_i32_1 = arith.constant 0 : i32
    return %c0_i32, %arg0, %c0_i32_0 : i32, i32, i32
  }
  func.func @transform_1(%arg0: i32) -> (i32, i32) {
    %c0_i32 = arith.constant 0 : i32
    %c0_i32_0 = arith.constant 0 : i32
    %c0_i32_1 = arith.constant 0 : i32
    return %c0_i32, %c0_i32_0 : i32, i32
  }
  func.func @transform_2(%arg0: i32) -> (i32, i32) {
    %c0_i32 = arith.constant 0 : i32
    %c0_i32_0 = arith.constant 0 : i32
    %c0_i32_1 = arith.constant 0 : i32
    return %c0_i32, %c0_i32_0 : i32, i32
  }
  func.func @transform_3(%arg0: i32) -> (i32, i32) {
    %c0_i32 = arith.constant 0 : i32
    %c0_i32_0 = arith.constant 0 : i32
    %c0_i32_1 = arith.constant 0 : i32
    return %c0_i32, %c0_i32_0 : i32, i32
  }
  func.func @transform_4(%arg0: i32) -> (i32, i32) {
    %c0_i32 = arith.constant 0 : i32
    %c0_i32_0 = arith.constant 0 : i32
    %c0_i32_1 = arith.constant 0 : i32
    return %c0_i32, %c0_i32_0 : i32, i32
  }
  func.func @transform_5(%arg0: i32) -> (i32, i32, i32) {
    %c0_i32 = arith.constant 0 : i32
    %c0_i32_0 = arith.constant 0 : i32
    %c0_i32_1 = arith.constant 0 : i32
    return %c0_i32, %arg0, %c0_i32_0 : i32, i32, i32
  }
}

module attributes {stable_mosaic.version = 11 : i64} {
  func.func @_head_kernel(%arg0: i32, %arg1: memref<16x16xf32, #tpu.memory_space<vmem>>, %arg2: memref<16x8xf32, #tpu.memory_space<vmem>>, %arg3: memref<1x8xf32, #tpu.memory_space<vmem>>, %arg4: memref<1x8xf32, #tpu.memory_space<vmem>>, %arg5: memref<1x1xf32, #tpu.memory_space<vmem>>, %arg6: memref<16x1xf32, #tpu.memory_space<vmem>>) attributes {dimension_semantics = [#tpu.dimension_semantics<parallel>], iteration_bounds = array<i64: 1>, scalar_prefetch = 0 : i64, scratch_operands = 0 : i64, tpu.core_type = #tpu.core_type<tc>, window_params = [{transform_indices = @transform_0, window_bounds = array<i64: 16, 16>}, {pipeline_mode = #tpu.pipeline_mode<synchronous>, transform_indices = @transform_1, window_bounds = array<i64: 16, 8>}, {pipeline_mode = #tpu.pipeline_mode<synchronous>, transform_indices = @transform_2, window_bounds = array<i64: 1, 8>}, {pipeline_mode = #tpu.pipeline_mode<synchronous>, transform_indices = @transform_3, window_bounds = array<i64: 1, 8>}, {pipeline_mode = #tpu.pipeline_mode<synchronous>, transform_indices = @transform_4, window_bounds = array<i64: 1, 1>}, {transform_indices = @transform_5, window_bounds = array<i64: 16, 1>}]} {
    %c0 = arith.constant 0 : index
    %c0_0 = arith.constant 0 : index
    %0 = vector.load %arg1[%c0, %c0_0] : memref<16x16xf32, #tpu.memory_space<vmem>>, vector<16x16xf32>
    %c0_1 = arith.constant 0 : index
    %c0_2 = arith.constant 0 : index
    %1 = vector.load %arg2[%c0_1, %c0_2] : memref<16x8xf32, #tpu.memory_space<vmem>>, vector<16x8xf32>
    %cst = arith.constant dense<0.000000e+00> : vector<16x8xf32>
    %2 = tpu.matmul %0, %1, %cst {dimension_numbers = #tpu.dot_dimension_numbers<[1], [0], [0], [1], [0, 0, 1, 1], [], []>} : vector<16x16xf32>, vector<16x8xf32>, vector<16x8xf32> -> vector<16x8xf32>
    %c0_3 = arith.constant 0 : index
    %c0_4 = arith.constant 0 : index
    %3 = vector.load %arg3[%c0_3, %c0_4] : memref<1x8xf32, #tpu.memory_space<vmem>>, vector<1x8xf32>
    %4 = vector.broadcast %3 : vector<1x8xf32> to vector<16x8xf32>
    %5 = arith.addf %2, %4 : vector<16x8xf32>
    %cst_5 = arith.constant 0.000000e+00 : f32
    %6 = vector.broadcast %cst_5 : f32 to vector<16x8xf32>
    %7 = arith.maximumf %5, %6 : vector<16x8xf32>
    %c0_6 = arith.constant 0 : index
    %c0_7 = arith.constant 0 : index
    %8 = vector.load %arg4[%c0_6, %c0_7] : memref<1x8xf32, #tpu.memory_space<vmem>>, vector<1x8xf32>
    %9 = vector.broadcast %8 : vector<1x8xf32> to vector<16x8xf32>
    %10 = arith.mulf %7, %9 : vector<16x8xf32>
    %cst_8 = arith.constant dense<0.000000e+00> : vector<16xf32>
    %11 = vector.multi_reduction <add>, %10, %cst_8 [1] : vector<16x8xf32> to vector<16xf32>
    %12 = vector.shape_cast %11 : vector<16xf32> to vector<16x1xf32>
    %c0_9 = arith.constant 0 : index
    %c0_10 = arith.constant 0 : index
    %13 = vector.load %arg5[%c0_9, %c0_10] : memref<1x1xf32, #tpu.memory_space<vmem>>, vector<1x1xf32>
    %14 = vector.broadcast %13 : vector<1x1xf32> to vector<16x1xf32>
    %15 = arith.addf %12, %14 : vector<16x1xf32>
    %16 = arith.negf %15 : vector<16x1xf32>
    %17 = math.exp %16 : vector<16x1xf32>
    %cst_11 = arith.constant 1.000000e+00 : f32
    %18 = vector.broadcast %cst_11 : f32 to vector<16x1xf32>
    %19 = arith.addf %18, %17 : vector<16x1xf32>
    %20 = arith.divf %18, %19 : vector<16x1xf32>
    %c0_12 = arith.constant 0 : index
    %c0_13 = arith.constant 0 : index
    %21 = vector.load %arg6[%c0_12, %c0_13] : memref<16x1xf32, #tpu.memory_space<vmem>>, vector<16x1xf32>
    tpu.vector_store %arg6[%c0_12, %c0_13], %20 {strides = array<i32>} : memref<16x1xf32, #tpu.memory_space<vmem>>, vector<16x1xf32>,
    return
  }
  func.func @transform_0(%arg0: i32) -> (i32, i32) {
    %c0_i32 = arith.constant 0 : i32
    %c0_i32_0 = arith.constant 0 : i32
    return %arg0, %c0_i32 : i32, i32
  }
  func.func @transform_1(%arg0: i32) -> (i32, i32) {
    %c0_i32 = arith.constant 0 : i32
    %c0_i32_0 = arith.constant 0 : i32
    %c0_i32_1 = arith.constant 0 : i32
    return %c0_i32, %c0_i32_0 : i32, i32
  }
  func.func @transform_2(%arg0: i32) -> (i32, i32) {
    %c0_i32 = arith.constant 0 : i32
    %c0_i32_0 = arith.constant 0 : i32
    %c0_i32_1 = arith.constant 0 : i32
    return %c0_i32, %c0_i32_0 : i32, i32
  }
  func.func @transform_3(%arg0: i32) -> (i32, i32) {
    %c0_i32 = arith.constant 0 : i32
    %c0_i32_0 = arith.constant 0 : i32
    %c0_i32_1 = arith.constant 0 : i32
    return %c0_i32, %c0_i32_0 : i32, i32
  }
  func.func @transform_4(%arg0: i32) -> (i32, i32) {
    %c0_i32 = arith.constant 0 : i32
    %c0_i32_0 = arith.constant 0 : i32
    %c0_i32_1 = arith.constant 0 : i32
    return %c0_i32, %c0_i32_0 : i32, i32
  }
  func.func @transform_5(%arg0: i32) -> (i32, i32) {
    %c0_i32 = arith.constant 0 : i32
    %c0_i32_0 = arith.constant 0 : i32
    return %arg0, %c0_i32 : i32, i32
  }
}

</mosaic_0001>

<llo_original>
// kernel: forward.7
$region0: #{forward.7}
  #allocation0 [shape = 'u32[]', space=smem, size = 0x4, offset = 0x4, fixed_abs, tag = 'smem constant byte address 0x4 - core index']
  #allocation1 [shape = 'u32[72,128]{1,0:T(1,128)}', space=vmem, size = 0x9000, scoped, tag = 'internal scratch']
  %s0 = inlined_call_operand.vmem [shape: f32[16,16], index: 0, kind: input, shape index: {}]
  %s1 = inlined_call_operand.vmem [shape: f32[16,128], index: 1, kind: input, shape index: {}]
  %s2 = inlined_call_operand.vmem [shape: f32[1,128], index: 2, kind: input, shape index: {}]
  %s3 = inlined_call_operand.vmem [shape: f32[16,128], index: 3, kind: output, shape index: {}]
  %s4 = sld [smem:[#allocation0]]
  $region22: #{forward.7} parent=0
    _
  %s6 = ssub.s32 1, %s4
  %s7 = scalar_select 0, %s6, %s4
  // Predicated region
  $region2: #{forward.7} parent=0 // pred_check
    _
  $region3: #{forward.7} parent=0 // pred_check_branch
    %9 = sbr.rel (0) target = $region5
  $region4: #{forward.7} parent=0 // pred_region
    _
  $region5: #{forward.7} parent=0 // pred_fallthru
    _
  // Predicated region
  $region6: #{forward.7} parent=0 // pred_check
    _
  $region7: #{forward.7} parent=0 // pred_check_branch
    %11 = sbr.rel (0) target = $region9
  $region8: #{forward.7} parent=0 // pred_region
    _
  $region9: #{forward.7} parent=0 // pred_fallthru
    _
  // Predicated region
  $region10: #{forward.7} parent=0 // pred_check
    _
  $region11: #{forward.7} parent=0 // pred_check_branch
    %13 = sbr.rel (0) target = $region13
  $region12: #{forward.7} parent=0 // pred_region
    _
  $region13: #{forward.7} parent=0 // pred_fallthru
    _
  %v14 = vld [vmem:[%s0] sm:$0xff]
  %v15 = vld [vmem:[%s0 + $0x8] sm:$0xff]
  %v16 = vld [vmem:[%s1] sm:$0xff]
  %v17 = vld [vmem:[%s1 + $0x8] sm:$0xff]
  %v18 = vld [vmem:[%s2] sm:$0x1]
  %v20 = vperm.slane %v18, 0
  %vm22 = vcmask 130048
  %v24 = vsel %vm22, %v14, 0
  %v27 = vsel %vm22, %v15, 0
  %29 = vmatpush.msra.mxu0 0.0
  %30 = vmatpush.msra.mxu0 0.0
  %31 = vmatpush.msra.mxu0 0.0
  %32 = vmatpush.msra.mxu0 0.0
  %33 = vmatpush.msra.mxu0 0.0
  %34 = vmatpush.msra.mxu0 0.0
  %35 = vmatpush.msra.mxu0 0.0
  %36 = vmatpush.msra.mxu0 0.0
  %37 = vmatpush.msra.mxu0 0.0
  %38 = vmatpush.msra.mxu0 0.0
  %39 = vmatpush.msra.mxu0 0.0
  %40 = vmatpush.msra.mxu0 0.0
  %41 = vmatpush.msra.mxu0 0.0
  %42 = vmatpush.msra.mxu0 0.0
  %43 = vmatpush.msra.mxu0 %v17
  %44 = vmatpush.msra.mxu0 %v16
  %45 = vmatmul.f32.gmra.mxu0 %v24
  %v46 = vpop.f32.mrf.mxu0
  %v47 = vadd.f32 %v20, %v46
  %48 = vmatmul.f32.gmra.mxu0 %v27
  %v49 = vpop.f32.mrf.mxu0
  %v50 = vadd.f32 %v20, %v49
  %51 = vdwg.mxu0
  %52 = vst [vmem:[%s3] sm:$0xff] %v47
  %53 = vst [vmem:[%s3 + $0x8] sm:$0xff] %v50
  // Predicated region
  $region14: #{forward.7} parent=0 // pred_check
    _
  $region15: #{forward.7} parent=0 // pred_check_branch
    %55 = sbr.rel (0) target = $region17
  $region16: #{forward.7} parent=0 // pred_region
    _
  $region17: #{forward.7} parent=0 // pred_fallthru
    _
  // Predicated region
  $region18: #{forward.7} parent=0 // pred_check
    _
  $region19: #{forward.7} parent=0 // pred_check_branch
    %57 = sbr.rel (0) target = $region21
  $region20: #{forward.7} parent=0 // pred_region
    _
  $region21: #{forward.7} parent=0 // pred_fallthru
    _

// kernel: forward.9
$region0: #{forward.9}
  #allocation0 [shape = 'u32[]', space=smem, size = 0x4, offset = 0x4, fixed_abs, tag = 'smem constant byte address 0x4 - core index']
  #allocation1 [shape = 'u32[72,128]{1,0:T(1,128)}', space=vmem, size = 0x9000, scoped, tag = 'internal scratch']
  %s0 = inlined_call_operand.vmem [shape: f32[16,76], index: 0, kind: input, shape index: {}]
  %s1 = inlined_call_operand.vmem [shape: f32[76,256], index: 1, kind: input, shape index: {}]
  %s2 = inlined_call_operand.vmem [shape: f32[1,256], index: 2, kind: input, shape index: {}]
  %s3 = inlined_call_operand.vmem [shape: f32[16,256], index: 3, kind: output, shape index: {}]
  %s4 = sld [smem:[#allocation0]]
  $region22: #{forward.9} parent=0
    _
  %s6 = ssub.s32 1, %s4
  %s7 = scalar_select 0, %s6, %s4
  // Predicated region
  $region2: #{forward.9} parent=0 // pred_check
    _
  $region3: #{forward.9} parent=0 // pred_check_branch
    %9 = sbr.rel (0) target = $region5
  $region4: #{forward.9} parent=0 // pred_region
    _
  $region5: #{forward.9} parent=0 // pred_fallthru
    _
  // Predicated region
  $region6: #{forward.9} parent=0 // pred_check
    _
  $region7: #{forward.9} parent=0 // pred_check_branch
    %11 = sbr.rel (0) target = $region9
  $region8: #{forward.9} parent=0 // pred_region
    _
  $region9: #{forward.9} parent=0 // pred_fallthru
    _
  // Predicated region
  $region10: #{forward.9} parent=0 // pred_check
    _
  $region11: #{forward.9} parent=0 // pred_check_branch
    %13 = sbr.rel (0) target = $region13
  $region12: #{forward.9} parent=0 // pred_region
    _
  $region13: #{forward.9} parent=0 // pred_fallthru
    _
  %v14 = vld [vmem:[%s0] sm:$0xff]
  %v15 = vld [vmem:[%s0 + $0x8] sm:$0xff]
  %v16 = vld [vmem:[%s1] sm:$0xff]
  %v17 = vld [vmem:[%s1 + $0x8] sm:$0xff]
  %v18 = vld [vmem:[%s1 + $0x10] sm:$0xff]
  %v19 = vld [vmem:[%s1 + $0x18] sm:$0xff]
  %v20 = vld [vmem:[%s1 + $0x20] sm:$0xff]
  %v21 = vld [vmem:[%s1 + $0x28] sm:$0xff]
  %v22 = vld [vmem:[%s1 + $0x30] sm:$0xff]
  %v23 = vld [vmem:[%s1 + $0x38] sm:$0xff]
  %v24 = vld [vmem:[%s1 + $0x40] sm:$0xff]
  %v25 = vld [vmem:[%s1 + $0x48] sm:$0xff]
  %v26 = vld [vmem:[%s1 + $0x50] sm:$0xff]
  %v27 = vld [vmem:[%s1 + $0x58] sm:$0xff]
  %v28 = vld [vmem:[%s1 + $0x60] sm:$0xff]
  %v29 = vld [vmem:[%s1 + $0x68] sm:$0xff]
  %v30 = vld [vmem:[%s1 + $0x70] sm:$0xff]
  %v31 = vld [vmem:[%s1 + $0x78] sm:$0xff]
  %v32 = vld [vmem:[%s1 + $0x80] sm:$0xff]
  %v33 = vld [vmem:[%s1 + $0x88] sm:$0xff]
  %v34 = vld [vmem:[%s1 + $0x90] sm:$0xf]
  %v35 = vld [vmem:[%s1 + $0x98] sm:$0xf]
  %v36 = vld [vmem:[%s2] sm:$0x3]
  %v38 = vperm.slane %v36, 0
  %v39 = vperm.slane %v36, 1
  %vm42 = vcmask 621568
  %v44 = vsel %vm42, %v14, 0
  %v47 = vsel %vm42, %v15, 0
  %vm49 = vcmask 1043456
  %v51 = vsel %vm49, %v34, 0
  %v54 = vsel %vm49, %v35, 0
  %56 = vmatpush.msra.mxu0 0.0
  %57 = vmatpush.msra.mxu0 0.0
  %58 = vmatpush.msra.mxu0 0.0
  %59 = vmatpush.msra.mxu0 0.0
  %60 = vmatpush.msra.mxu0 0.0
  %61 = vmatpush.msra.mxu0 0.0
  %62 = vmatpush.msra.mxu0 %v51
  %63 = vmatpush.msra.mxu0 %v32
  %64 = vmatpush.msra.mxu0 %v30
  %65 = vmatpush.msra.mxu0 %v28
  %66 = vmatpush.msra.mxu0 %v26
  %67 = vmatpush.msra.mxu0 %v24
  %68 = vmatpush.msra.mxu0 %v22
  %69 = vmatpush.msra.mxu0 %v20
  %70 = vmatpush.msra.mxu0 %v18
  %71 = vmatpush.msra.mxu0 %v16
  %72 = vmatmul.f32.gmra.mxu0 %v44
  %v73 = vpop.f32.mrf.mxu0
  %v74 = vadd.f32 %v38, %v73
  %75 = vmatmul.f32.gmra.mxu0 %v47
  %v76 = vpop.f32.mrf.mxu0
  %v77 = vadd.f32 %v38, %v76
  %78 = vdwg.mxu0
  %79 = vmatpush.msra.mxu0 0.0
  %80 = vmatpush.msra.mxu0 0.0
  %81 = vmatpush.msra.mxu0 0.0
  %82 = vmatpush.msra.mxu0 0.0
  %83 = vmatpush.msra.mxu0 0.0
  %84 = vmatpush.msra.mxu0 0.0
  %85 = vmatpush.msra.mxu0 %v54
  %86 = vmatpush.msra.mxu0 %v33
  %87 = vmatpush.msra.mxu0 %v31
  %88 = vmatpush.msra.mxu0 %v29
  %89 = vmatpush.msra.mxu0 %v27
  %90 = vmatpush.msra.mxu0 %v25
  %91 = vmatpush.msra.mxu0 %v23
  %92 = vmatpush.msra.mxu0 %v21
  %93 = vmatpush.msra.mxu0 %v19
  %94 = vmatpush.msra.mxu0 %v17
  %95 = vmatmul.f32.gmra.mxu0 %v44
  %v96 = vpop.f32.mrf.mxu0
  %v97 = vadd.f32 %v39, %v96
  %98 = vmatmul.f32.gmra.mxu0 %v47
  %v99 = vpop.f32.mrf.mxu0
  %v100 = vadd.f32 %v39, %v99
  %101 = vdwg.mxu0
  %102 = vst [vmem:[%s3] sm:$0xff] %v74
  %103 = vst [vmem:[%s3 + $0x8] sm:$0xff] %v97
  %104 = vst [vmem:[%s3 + $0x10] sm:$0xff] %v77
  %105 = vst [vmem:[%s3 + $0x18] sm:$0xff] %v100
  // Predicated region
  $region14: #{forward.9} parent=0 // pred_check
    _
  $region15: #{forward.9} parent=0 // pred_check_branch
    %107 = sbr.rel (0) target = $region17
  $region16: #{forward.9} parent=0 // pred_region
    _
  $region17: #{forward.9} parent=0 // pred_fallthru
    _
  // Predicated region
  $region18: #{forward.9} parent=0 // pred_check
    _
  $region19: #{forward.9} parent=0 // pred_check_branch
    %109 = sbr.rel (0) target = $region21
  $region20: #{forward.9} parent=0 // pred_region
    _
  $region21: #{forward.9} parent=0 // pred_fallthru
    _

// kernel: forward.8
$region0: #{forward.8}
  #allocation0 [shape = 'u32[]', space=smem, size = 0x4, offset = 0x4, fixed_abs, tag = 'smem constant byte address 0x4 - core index']
  #allocation1 [shape = 'u32[72,128]{1,0:T(1,128)}', space=vmem, size = 0x9000, scoped, tag = 'internal scratch']
  #allocation2 [shape = 'f32[2,64]{1,0:T(2,128)}', space=vmem, size = 0x400, scoped, tag = 'scratch operand']
  %s0 = inlined_call_operand.vmem [shape: f32[8,2,128], index: 0, kind: input, shape index: {}]
  %s1 = inlined_call_operand.vmem [shape: f32[128,192], index: 1, kind: input, shape index: {}]
  %s2 = inlined_call_operand.vmem [shape: f32[1,192], index: 2, kind: input, shape index: {}]
  %s3 = inlined_call_operand.vmem [shape: f32[64,192], index: 3, kind: input, shape index: {}]
  %s4 = inlined_call_operand.vmem [shape: f32[1,64], index: 4, kind: input, shape index: {}]
  %s5 = inlined_call_operand.vmem [shape: f32[8,2,64], index: 5, kind: output, shape index: {}]
  %s6 = sld [smem:[#allocation0]]
  $region37: #{forward.8} parent=0
    _
  %s8 = ssub.s32 1, %s6
  %s9 = scalar_select 0, %s8, %s6
  // Predicated region
  $region2: #{forward.8} parent=0 // pred_check
    _
  $region3: #{forward.8} parent=0 // pred_check_branch
    %11 = sbr.rel (0) target = $region5
  $region4: #{forward.8} parent=0 // pred_region
    _
  $region5: #{forward.8} parent=0 // pred_fallthru
    _
  // Predicated region
  $region6: #{forward.8} parent=0 // pred_check
    _
  $region7: #{forward.8} parent=0 // pred_check_branch
    %13 = sbr.rel (0) target = $region9
  $region8: #{forward.8} parent=0 // pred_region
    _
  $region9: #{forward.8} parent=0 // pred_fallthru
    _
  // Predicated region
  $region10: #{forward.8} parent=0 // pred_check
    _
  $region11: #{forward.8} parent=0 // pred_check_branch
    %15 = sbr.rel (0) target = $region13
  $region12: #{forward.8} parent=0 // pred_region
    _
  $region13: #{forward.8} parent=0 // pred_fallthru
    _
  // Predicated region
  $region14: #{forward.8} parent=0 // pred_check
    _
  $region15: #{forward.8} parent=0 // pred_check_branch
    %17 = sbr.rel (0) target = $region17
  $region16: #{forward.8} parent=0 // pred_region
    _
  $region17: #{forward.8} parent=0 // pred_fallthru
    _
  // Predicated region
  $region18: #{forward.8} parent=0 // pred_check
    _
  $region19: #{forward.8} parent=0 // pred_check_branch
    %19 = sbr.rel (0) target = $region21
  $region20: #{forward.8} parent=0 // pred_region
    _
  $region21: #{forward.8} parent=0 // pred_fallthru
    _
  %vm20 = vcmask 517120
  %21 = vst.msk [vmem:[#allocation2] sm:$0x3] %vm20, 0.0
  loop: start=0, step=1, limit=8
  $region22: #{forward.8} parent=0 // loop_pre_header
    _
  $region23: #{forward.8} parent=0 // loop_header
    %s23 = sphi 0, %s27
    %p24 = scmp.ge.s32.totalorder %s23, 8
  $region24: #{forward.8} parent=0 // loop_header_branch
    %26 = sbr.rel (%p24) target = $region28
  $region25: #{forward.8} parent=0 // loop_body
    %s28 = smul.u32 %s23, 2
    %s29 = scalar_lea.vmem %s0, %s28
    %v30 = vld [vmem:[%s29] sm:$0x3]
    %v31 = vld [vmem:[%s1] sm:$0xff]
    %v32 = vld [vmem:[%s1 + $0x8] sm:$0xff]
    %v33 = vld [vmem:[%s1 + $0x10] sm:$0xff]
    %v34 = vld [vmem:[%s1 + $0x18] sm:$0xff]
    %v35 = vld [vmem:[%s1 + $0x20] sm:$0xff]
    %v36 = vld [vmem:[%s1 + $0x28] sm:$0xff]
    %v37 = vld [vmem:[%s1 + $0x30] sm:$0xff]
    %v38 = vld [vmem:[%s1 + $0x38] sm:$0xff]
    %v39 = vld [vmem:[%s1 + $0x40] sm:$0xff]
    %v40 = vld [vmem:[%s1 + $0x48] sm:$0xff]
    %v41 = vld [vmem:[%s1 + $0x50] sm:$0xff]
    %v42 = vld [vmem:[%s1 + $0x58] sm:$0xff]
    %v43 = vld [vmem:[%s1 + $0x60] sm:$0xff]
    %v44 = vld [vmem:[%s1 + $0x68] sm:$0xff]
    %v45 = vld [vmem:[%s1 + $0x70] sm:$0xff]
    %v46 = vld [vmem:[%s1 + $0x78] sm:$0xff]
    %v47 = vld [vmem:[%s1 + $0x80] sm:$0xff]
    %v48 = vld [vmem:[%s1 + $0x88] sm:$0xff]
    %v49 = vld [vmem:[%s1 + $0x90] sm:$0xff]
    %v50 = vld [vmem:[%s1 + $0x98] sm:$0xff]
    %v51 = vld [vmem:[%s1 + $0xa0] sm:$0xff]
    %v52 = vld [vmem:[%s1 + $0xa8] sm:$0xff]
    %v53 = vld [vmem:[%s1 + $0xb0] sm:$0xff]
    %v54 = vld [vmem:[%s1 + $0xb8] sm:$0xff]
    %v55 = vld [vmem:[%s1 + $0xc0] sm:$0xff]
    %v56 = vld [vmem:[%s1 + $0xc8] sm:$0xff]
    %v57 = vld [vmem:[%s1 + $0xd0] sm:$0xff]
    %v58 = vld [vmem:[%s1 + $0xd8] sm:$0xff]
    %v59 = vld [vmem:[%s1 + $0xe0] sm:$0xff]
    %v60 = vld [vmem:[%s1 + $0xe8] sm:$0xff]
    %v61 = vld [vmem:[%s1 + $0xf0] sm:$0xff]
    %v62 = vld [vmem:[%s1 + $0xf8] sm:$0xff]
    %v63 = vld [vmem:[%s2] sm:$0x3]
    %v65 = vperm.slane %v63, 0
    %v66 = vperm.slane %v63, 1
    %69 = vmatpush.msra.mxu0 %v61
    %70 = vmatpush.msra.mxu0 %v59
    %71 = vmatpush.msra.mxu0 %v57
    %72 = vmatpush.msra.mxu0 %v55
    %73 = vmatpush.msra.mxu0 %v53
    %74 = vmatpush.msra.mxu0 %v51
    %75 = vmatpush.msra.mxu0 %v49
    %76 = vmatpush.msra.mxu0 %v47
    %77 = vmatpush.msra.mxu0 %v45
    %78 = vmatpush.msra.mxu0 %v43
    %79 = vmatpush.msra.mxu0 %v41
    %80 = vmatpush.msra.mxu0 %v39
    %81 = vmatpush.msra.mxu0 %v37
    %82 = vmatpush.msra.mxu0 %v35
    %83 = vmatpush.msra.mxu0 %v33
    %84 = vmatpush.msra.mxu0 %v31
    %85 = vmatmul.f32.gmra.mxu0 %v30
    %v86 = vpop.f32.mrf.mxu0
    %v87 = vadd.f32 %v65, %v86
    %88 = vdwg.mxu0
    %89 = vmatpush.msra.mxu0 %v62
    %90 = vmatpush.msra.mxu0 %v60
    %91 = vmatpush.msra.mxu0 %v58
    %92 = vmatpush.msra.mxu0 %v56
    %93 = vmatpush.msra.mxu0 %v54
    %94 = vmatpush.msra.mxu0 %v52
    %95 = vmatpush.msra.mxu0 %v50
    %96 = vmatpush.msra.mxu0 %v48
    %97 = vmatpush.msra.mxu0 %v46
    %98 = vmatpush.msra.mxu0 %v44
    %99 = vmatpush.msra.mxu0 %v42
    %100 = vmatpush.msra.mxu0 %v40
    %101 = vmatpush.msra.mxu0 %v38
    %102 = vmatpush.msra.mxu0 %v36
    %103 = vmatpush.msra.mxu0 %v34
    %104 = vmatpush.msra.mxu0 %v32
    %105 = vmatmul.f32.gmra.mxu0 %v30
    %v106 = vpop.f32.mrf.mxu0
    %v107 = vadd.f32 %v66, %v106
    %108 = vdwg.mxu0
    %v109 = vld [vmem:[#allocation2] sm:$0x3]
    %v110 = vld [vmem:[%s3] sm:$0xff]
    %v111 = vld [vmem:[%s3 + $0x8] sm:$0xff]
    %v112 = vld [vmem:[%s3 + $0x10] sm:$0xff]
    %v113 = vld [vmem:[%s3 + $0x18] sm:$0xff]
    %v114 = vld [vmem:[%s3 + $0x20] sm:$0xff]
    %v115 = vld [vmem:[%s3 + $0x28] sm:$0xff]
    %v116 = vld [vmem:[%s3 + $0x30] sm:$0xff]
    %v117 = vld [vmem:[%s3 + $0x38] sm:$0xff]
    %v118 = vld [vmem:[%s3 + $0x40] sm:$0xff]
    %v119 = vld [vmem:[%s3 + $0x48] sm:$0xff]
    %v120 = vld [vmem:[%s3 + $0x50] sm:$0xff]
    %v121 = vld [vmem:[%s3 + $0x58] sm:$0xff]
    %v122 = vld [vmem:[%s3 + $0x60] sm:$0xff]
    %v123 = vld [vmem:[%s3 + $0x68] sm:$0xff]
    %v124 = vld [vmem:[%s3 + $0x70] sm:$0xff]
    %v125 = vld [vmem:[%s3 + $0x78] sm:$0xff]
    %vm126 = vcmask 523264
    %v128 = vsel %vm126, %v109, 0
    %130 = vmatpush.msra.mxu0 0.0
    %131 = vmatpush.msra.mxu0 0.0
    %132 = vmatpush.msra.mxu0 0.0
    %133 = vmatpush.msra.mxu0 0.0
    %134 = vmatpush.msra.mxu0 0.0
    %135 = vmatpush.msra.mxu0 0.0
    %136 = vmatpush.msra.mxu0 0.0
    %137 = vmatpush.msra.mxu0 0.0
    %138 = vmatpush.msra.mxu0 %v124
    %139 = vmatpush.msra.mxu0 %v122
    %140 = vmatpush.msra.mxu0 %v120
    %141 = vmatpush.msra.mxu0 %v118
    %142 = vmatpush.msra.mxu0 %v116
    %143 = vmatpush.msra.mxu0 %v114
    %144 = vmatpush.msra.mxu0 %v112
    %145 = vmatpush.msra.mxu0 %v110
    %146 = vmatmul.f32.gmra.mxu0 %v128
    %v147 = vpop.f32.mrf.mxu0
    %v148 = vadd.f32 0.0, %v147
    %149 = vdwg.mxu0
    %150 = vmatpush.msra.mxu0 0.0
    %151 = vmatpush.msra.mxu0 0.0
    %152 = vmatpush.msra.mxu0 0.0
    %153 = vmatpush.msra.mxu0 0.0
    %154 = vmatpush.msra.mxu0 0.0
    %155 = vmatpush.msra.mxu0 0.0
    %156 = vmatpush.msra.mxu0 0.0
    %157 = vmatpush.msra.mxu0 0.0
    %158 = vmatpush.msra.mxu0 %v125
    %159 = vmatpush.msra.mxu0 %v123
    %160 = vmatpush.msra.mxu0 %v121
    %161 = vmatpush.msra.mxu0 %v119
    %162 = vmatpush.msra.mxu0 %v117
    %163 = vmatpush.msra.mxu0 %v115
    %164 = vmatpush.msra.mxu0 %v113
    %165 = vmatpush.msra.mxu0 %v111
    %166 = vmatmul.f32.gmra.mxu0 %v128
    %v167 = vpop.f32.mrf.mxu0
    %v168 = vadd.f32 0.0, %v167
    %169 = vdwg.mxu0
    %v170 = vadd.f32 %v87, %v148
    %v171 = vxor.u32 %v170, 2147483648
    %v172 = vmul.f32 %v171, 1.442695
    %v173 = vpow.pop %v172
    %v174 = vadd.f32 %v173, 1.0
    %v175 = vrcp.pop %v174
    %v176 = vmul.f32 %v174, %v175
    %v177 = vsub.f32 1.0, %v176
    %v178 = vmul.f32 %v175, %v177
    %v179 = vadd.f32 %v175, %v178
    %vm180 = vweird.f32 %v174
    %vm181 = vweird.f32 %v175
    %vm182 = vmor %vm180, %vm181
    %v183 = vsel %vm182, %v175, %v179
    %v184 = vand.u32 2147483647, %v174
    %vm185 = vcmp.eq.f32.partialorder %v184, 8.507059e+37
    %v186 = vand.u32 %v174, 2147483648
    %v187 = vor.u32 1.1754944e-38, %v186
    %v188 = vsel %vm185, %v187, %v183
    %v189 = vmul.f32 1.0, %v188
    %v190 = vld [vmem:[%s4] sm:$0x1]
    %v192 = vperm.slane %v190, 0
    %v194 = vadd.f32 %v168, %v192
    %v195 = vmul.f32 %v189, %v194
    %v196 = vadd.f32 %v107, %v195
    %v197 = vtanh.pop %v196
    %v198 = vsub.f32 1.0, %v189
    %200 = vrot.lane.b32.xlu0 %v197, 64
    %v201 = vpop.permute.xlu0 %200
    %v203 = vmul.f32 %v198, %v201
    %204 = vrot.lane.b32.xlu0 %v109, 64
    %v205 = vpop.permute.xlu0 %204
    %v207 = vmul.f32 %v189, %v205
    %v208 = vadd.f32 %v203, %v207
    %210 = vrot.lane.b32.xlu0 %v208, 64
    %v211 = vpop.permute.xlu0 %210
    %213 = vst.msk [vmem:[#allocation2] sm:$0x3] %vm20, %v211
    %s214 = scalar_lea.vmem %s5, %s28
    %215 = vst.msk [vmem:[%s214] sm:$0x3] %vm20, %v211
  $region26: #{forward.8} parent=0 // loop_footer
    %s27 = sadd.s32 1, %s23
  $region27: #{forward.8} parent=0 // loop_footer_branch
    %22 = sbr.rel target = $region23
  $region28: #{forward.8} parent=0 // loop_exit
    _
  // Predicated region
  $region29: #{forward.8} parent=0 // pred_check
    _
  $region30: #{forward.8} parent=0 // pred_check_branch
    %217 = sbr.rel (0) target = $region32
  $region31: #{forward.8} parent=0 // pred_region
    _
  $region32: #{forward.8} parent=0 // pred_fallthru
    _
  // Predicated region
  $region33: #{forward.8} parent=0 // pred_check
    _
  $region34: #{forward.8} parent=0 // pred_check_branch
    %219 = sbr.rel (0) target = $region36
  $region35: #{forward.8} parent=0 // pred_region
    _
  $region36: #{forward.8} parent=0 // pred_fallthru
    _

// kernel: forward.10
$region0: #{forward.10}
  #allocation0 [shape = 'u32[]', space=smem, size = 0x4, offset = 0x4, fixed_abs, tag = 'smem constant byte address 0x4 - core index']
  #allocation1 [shape = 'u32[72,128]{1,0:T(1,128)}', space=vmem, size = 0x9000, scoped, tag = 'internal scratch']
  #allocation2 [shape = 'f32[8,32]{1,0:T(8,128)}', space=vmem, size = 0x1000, scoped, tag = 'scratch operand']
  %s0 = inlined_call_operand.vmem [shape: f32[8,8,64], index: 0, kind: input, shape index: {}]
  %s1 = inlined_call_operand.vmem [shape: f32[64,96], index: 1, kind: input, shape index: {}]
  %s2 = inlined_call_operand.vmem [shape: f32[1,96], index: 2, kind: input, shape index: {}]
  %s3 = inlined_call_operand.vmem [shape: f32[32,96], index: 3, kind: input, shape index: {}]
  %s4 = inlined_call_operand.vmem [shape: f32[1,32], index: 4, kind: input, shape index: {}]
  %s5 = inlined_call_operand.vmem [shape: f32[8,8,32], index: 5, kind: output, shape index: {}]
  %s6 = sld [smem:[#allocation0]]
  $region37: #{forward.10} parent=0
    _
  %s8 = ssub.s32 1, %s6
  %s9 = scalar_select 0, %s8, %s6
  // Predicated region
  $region2: #{forward.10} parent=0 // pred_check
    _
  $region3: #{forward.10} parent=0 // pred_check_branch
    %11 = sbr.rel (0) target = $region5
  $region4: #{forward.10} parent=0 // pred_region
    _
  $region5: #{forward.10} parent=0 // pred_fallthru
    _
  // Predicated region
  $region6: #{forward.10} parent=0 // pred_check
    _
  $region7: #{forward.10} parent=0 // pred_check_branch
    %13 = sbr.rel (0) target = $region9
  $region8: #{forward.10} parent=0 // pred_region
    _
  $region9: #{forward.10} parent=0 // pred_fallthru
    _
  // Predicated region
  $region10: #{forward.10} parent=0 // pred_check
    _
  $region11: #{forward.10} parent=0 // pred_check_branch
    %15 = sbr.rel (0) target = $region13
  $region12: #{forward.10} parent=0 // pred_region
    _
  $region13: #{forward.10} parent=0 // pred_fallthru
    _
  // Predicated region
  $region14: #{forward.10} parent=0 // pred_check
    _
  $region15: #{forward.10} parent=0 // pred_check_branch
    %17 = sbr.rel (0) target = $region17
  $region16: #{forward.10} parent=0 // pred_region
    _
  $region17: #{forward.10} parent=0 // pred_fallthru
    _
  // Predicated region
  $region18: #{forward.10} parent=0 // pred_check
    _
  $region19: #{forward.10} parent=0 // pred_check_branch
    %19 = sbr.rel (0) target = $region21
  $region20: #{forward.10} parent=0 // pred_region
    _
  $region21: #{forward.10} parent=0 // pred_fallthru
    _
  %vm20 = vcmask 261120
  %21 = vst.msk [vmem:[#allocation2] sm:$0xff] %vm20, 0.0
  loop: start=0, step=1, limit=8
  $region22: #{forward.10} parent=0 // loop_pre_header
    _
  $region23: #{forward.10} parent=0 // loop_header
    %s23 = sphi 0, %s27
    %p24 = scmp.ge.s32.totalorder %s23, 8
  $region24: #{forward.10} parent=0 // loop_header_branch
    %26 = sbr.rel (%p24) target = $region28
  $region25: #{forward.10} parent=0 // loop_body
    %s28 = smul.u32 %s23, 8
    %s29 = scalar_lea.vmem %s0, %s28
    %v30 = vld [vmem:[%s29] sm:$0xff]
    %v31 = vld [vmem:[%s1] sm:$0xff]
    %v32 = vld [vmem:[%s1 + $0x8] sm:$0xff]
    %v33 = vld [vmem:[%s1 + $0x10] sm:$0xff]
    %v34 = vld [vmem:[%s1 + $0x18] sm:$0xff]
    %v35 = vld [vmem:[%s1 + $0x20] sm:$0xff]
    %v36 = vld [vmem:[%s1 + $0x28] sm:$0xff]
    %v37 = vld [vmem:[%s1 + $0x30] sm:$0xff]
    %v38 = vld [vmem:[%s1 + $0x38] sm:$0xff]
    %v39 = vld [vmem:[%s2] sm:$0x1]
    %v41 = vperm.slane %v39, 0
    %vm43 = vcmask 523264
    %v45 = vsel %vm43, %v30, 0
    %47 = vmatpush.msra.mxu0 0.0
    %48 = vmatpush.msra.mxu0 0.0
    %49 = vmatpush.msra.mxu0 0.0
    %50 = vmatpush.msra.mxu0 0.0
    %51 = vmatpush.msra.mxu0 0.0
    %52 = vmatpush.msra.mxu0 0.0
    %53 = vmatpush.msra.mxu0 0.0
    %54 = vmatpush.msra.mxu0 0.0
    %55 = vmatpush.msra.mxu0 %v38
    %56 = vmatpush.msra.mxu0 %v37
    %57 = vmatpush.msra.mxu0 %v36
    %58 = vmatpush.msra.mxu0 %v35
    %59 = vmatpush.msra.mxu0 %v34
    %60 = vmatpush.msra.mxu0 %v33
    %61 = vmatpush.msra.mxu0 %v32
    %62 = vmatpush.msra.mxu0 %v31
    %63 = vmatmul.f32.gmra.mxu0 %v45
    %v64 = vpop.f32.mrf.mxu0
    %v65 = vadd.f32 %v41, %v64
    %66 = vdwg.mxu0
    %v67 = vld [vmem:[#allocation2] sm:$0xff]
    %v68 = vld [vmem:[%s3] sm:$0xff]
    %v69 = vld [vmem:[%s3 + $0x8] sm:$0xff]
    %v70 = vld [vmem:[%s3 + $0x10] sm:$0xff]
    %v71 = vld [vmem:[%s3 + $0x18] sm:$0xff]
    %v73 = vsel %vm20, %v67, 0
    %75 = vmatpush.msra.mxu0 0.0
    %76 = vmatpush.msra.mxu0 0.0
    %77 = vmatpush.msra.mxu0 0.0
    %78 = vmatpush.msra.mxu0 0.0
    %79 = vmatpush.msra.mxu0 0.0
    %80 = vmatpush.msra.mxu0 0.0
    %81 = vmatpush.msra.mxu0 0.0
    %82 = vmatpush.msra.mxu0 0.0
    %83 = vmatpush.msra.mxu0 0.0
    %84 = vmatpush.msra.mxu0 0.0
    %85 = vmatpush.msra.mxu0 0.0
    %86 = vmatpush.msra.mxu0 0.0
    %87 = vmatpush.msra.mxu0 %v71
    %88 = vmatpush.msra.mxu0 %v70
    %89 = vmatpush.msra.mxu0 %v69
    %90 = vmatpush.msra.mxu0 %v68
    %91 = vmatmul.f32.gmra.mxu0 %v73
    %v92 = vpop.f32.mrf.mxu0
    %v93 = vadd.f32 0.0, %v92
    %94 = vdwg.mxu0
    %v95 = vadd.f32 %v65, %v93
    %v96 = vxor.u32 %v95, 2147483648
    %v97 = vmul.f32 %v96, 1.442695
    %v98 = vpow.pop %v97
    %v99 = vadd.f32 %v98, 1.0
    %v100 = vrcp.pop %v99
    %v101 = vmul.f32 %v99, %v100
    %v102 = vsub.f32 1.0, %v101
    %v103 = vmul.f32 %v100, %v102
    %v104 = vadd.f32 %v100, %v103
    %vm105 = vweird.f32 %v99
    %vm106 = vweird.f32 %v100
    %vm107 = vmor %vm105, %vm106
    %v108 = vsel %vm107, %v100, %v104
    %v109 = vand.u32 2147483647, %v99
    %vm110 = vcmp.eq.f32.partialorder %v109, 8.507059e+37
    %v111 = vand.u32 %v99, 2147483648
    %v112 = vor.u32 1.1754944e-38, %v111
    %v113 = vsel %vm110, %v112, %v108
    %v114 = vmul.f32 1.0, %v113
    %v115 = vld [vmem:[%s4] sm:$0x1]
    %v117 = vperm.slane %v115, 0
    %118 = vrot.lane.b32.xlu0 %v117, 64
    %v119 = vpop.permute.xlu0 %118
    %v121 = vadd.f32 %v93, %v119
    %123 = vrot.lane.b32.xlu0 %v121, 64
    %v124 = vpop.permute.xlu0 %123
    %v126 = vmul.f32 %v114, %v124
    %128 = vrot.lane.b32.xlu0 %v126, 64
    %v129 = vpop.permute.xlu0 %128
    %v131 = vadd.f32 %v65, %v129
    %v132 = vtanh.pop %v131
    %v133 = vsub.f32 1.0, %v114
    %135 = vrot.lane.b32.xlu0 %v132, 96
    %v136 = vpop.permute.xlu0 %135
    %v138 = vmul.f32 %v133, %v136
    %139 = vrot.lane.b32.xlu0 %v67, 32
    %v140 = vpop.permute.xlu0 %139
    %v142 = vmul.f32 %v114, %v140
    %v143 = vadd.f32 %v138, %v142
    %145 = vrot.lane.b32.xlu0 %v143, 96
    %v146 = vpop.permute.xlu0 %145
    %148 = vst.msk [vmem:[#allocation2] sm:$0xff] %vm20, %v146
    %s149 = scalar_lea.vmem %s5, %s28
    %150 = vst.msk [vmem:[%s149] sm:$0xff] %vm20, %v146
  $region26: #{forward.10} parent=0 // loop_footer
    %s27 = sadd.s32 1, %s23
  $region27: #{forward.10} parent=0 // loop_footer_branch
    %22 = sbr.rel target = $region23
  $region28: #{forward.10} parent=0 // loop_exit
    _
  // Predicated region
  $region29: #{forward.10} parent=0 // pred_check
    _
  $region30: #{forward.10} parent=0 // pred_check_branch
    %152 = sbr.rel (0) target = $region32
  $region31: #{forward.10} parent=0 // pred_region
    _
  $region32: #{forward.10} parent=0 // pred_fallthru
    _
  // Predicated region
  $region33: #{forward.10} parent=0 // pred_check
    _
  $region34: #{forward.10} parent=0 // pred_check_branch
    %154 = sbr.rel (0) target = $region36
  $region35: #{forward.10} parent=0 // pred_region
    _
  $region36: #{forward.10} parent=0 // pred_fallthru
    _

// kernel: forward.11
$region0: #{forward.11}
  #allocation0 [shape = 'u32[]', space=smem, size = 0x4, offset = 0x4, fixed_abs, tag = 'smem constant byte address 0x4 - core index']
  #allocation1 [shape = 'u32[72,128]{1,0:T(1,128)}', space=vmem, size = 0x9000, scoped, tag = 'internal scratch']
  %s0 = inlined_call_operand.vmem [shape: f32[16,152], index: 0, kind: input, shape index: {}]
  %s1 = inlined_call_operand.vmem [shape: f32[152,32], index: 1, kind: input, shape index: {}]
  %s2 = inlined_call_operand.vmem [shape: f32[1,32], index: 2, kind: input, shape index: {}]
  %s3 = inlined_call_operand.vmem [shape: f32[16,32], index: 3, kind: output, shape index: {}]
  %s4 = sld [smem:[#allocation0]]
  $region22: #{forward.11} parent=0
    _
  %s6 = ssub.s32 1, %s4
  %s7 = scalar_select 0, %s6, %s4
  // Predicated region
  $region2: #{forward.11} parent=0 // pred_check
    _
  $region3: #{forward.11} parent=0 // pred_check_branch
    %9 = sbr.rel (0) target = $region5
  $region4: #{forward.11} parent=0 // pred_region
    _
  $region5: #{forward.11} parent=0 // pred_fallthru
    _
  // Predicated region
  $region6: #{forward.11} parent=0 // pred_check
    _
  $region7: #{forward.11} parent=0 // pred_check_branch
    %11 = sbr.rel (0) target = $region9
  $region8: #{forward.11} parent=0 // pred_region
    _
  $region9: #{forward.11} parent=0 // pred_fallthru
    _
  // Predicated region
  $region10: #{forward.11} parent=0 // pred_check
    _
  $region11: #{forward.11} parent=0 // pred_check_branch
    %13 = sbr.rel (0) target = $region13
  $region12: #{forward.11} parent=0 // pred_region
    _
  $region13: #{forward.11} parent=0 // pred_fallthru
    _
  %v14 = vld [vmem:[%s0] sm:$0xff]
  %v15 = vld [vmem:[%s0 + $0x8] sm:$0xff]
  %v16 = vld [vmem:[%s0 + $0x10] sm:$0xff]
  %v17 = vld [vmem:[%s0 + $0x18] sm:$0xff]
  %v18 = vld [vmem:[%s1] sm:$0xff]
  %v19 = vld [vmem:[%s1 + $0x8] sm:$0xff]
  %v20 = vld [vmem:[%s1 + $0x10] sm:$0xff]
  %v21 = vld [vmem:[%s1 + $0x18] sm:$0xff]
  %v22 = vld [vmem:[%s1 + $0x20] sm:$0xff]
  %v23 = vld [vmem:[%s1 + $0x28] sm:$0xff]
  %v24 = vld [vmem:[%s1 + $0x30] sm:$0xff]
  %v25 = vld [vmem:[%s1 + $0x38] sm:$0xff]
  %v26 = vld [vmem:[%s1 + $0x40] sm:$0xff]
  %v27 = vld [vmem:[%s1 + $0x48] sm:$0xff]
  %v28 = vld [vmem:[%s1 + $0x50] sm:$0xff]
  %v29 = vld [vmem:[%s1 + $0x58] sm:$0xff]
  %v30 = vld [vmem:[%s1 + $0x60] sm:$0xff]
  %v31 = vld [vmem:[%s1 + $0x68] sm:$0xff]
  %v32 = vld [vmem:[%s1 + $0x70] sm:$0xff]
  %v33 = vld [vmem:[%s1 + $0x78] sm:$0xff]
  %v34 = vld [vmem:[%s1 + $0x80] sm:$0xff]
  %v35 = vld [vmem:[%s1 + $0x88] sm:$0xff]
  %v36 = vld [vmem:[%s1 + $0x90] sm:$0xff]
  %v37 = vld [vmem:[%s2] sm:$0x1]
  %v39 = vperm.slane %v37, 0
  %vm41 = vcmask 195584
  %v43 = vsel %vm41, %v15, 0
  %v46 = vsel %vm41, %v17, 0
  %48 = vmatpush.msra.mxu0 %v33
  %49 = vmatpush.msra.mxu0 %v32
  %50 = vmatpush.msra.mxu0 %v31
  %51 = vmatpush.msra.mxu0 %v30
  %52 = vmatpush.msra.mxu0 %v29
  %53 = vmatpush.msra.mxu0 %v28
  %54 = vmatpush.msra.mxu0 %v27
  %55 = vmatpush.msra.mxu0 %v26
  %56 = vmatpush.msra.mxu0 %v25
  %57 = vmatpush.msra.mxu0 %v24
  %58 = vmatpush.msra.mxu0 %v23
  %59 = vmatpush.msra.mxu0 %v22
  %60 = vmatpush.msra.mxu0 %v21
  %61 = vmatpush.msra.mxu0 %v20
  %62 = vmatpush.msra.mxu0 %v19
  %63 = vmatpush.msra.mxu0 %v18
  %64 = vmatmul.f32.gmra.mxu0 %v14
  %v65 = vpop.f32.mrf.mxu0
  %v66 = vadd.f32 %v39, %v65
  %67 = vmatmul.f32.gmra.mxu0 %v16
  %v68 = vpop.f32.mrf.mxu0
  %v69 = vadd.f32 %v39, %v68
  %70 = vdwg.mxu0
  %71 = vmatpush.msra.mxu0 0.0
  %72 = vmatpush.msra.mxu0 0.0
  %73 = vmatpush.msra.mxu0 0.0
  %74 = vmatpush.msra.mxu0 0.0
  %75 = vmatpush.msra.mxu0 0.0
  %76 = vmatpush.msra.mxu0 0.0
  %77 = vmatpush.msra.mxu0 0.0
  %78 = vmatpush.msra.mxu0 0.0
  %79 = vmatpush.msra.mxu0 0.0
  %80 = vmatpush.msra.mxu0 0.0
  %81 = vmatpush.msra.mxu0 0.0
  %82 = vmatpush.msra.mxu0 0.0
  %83 = vmatpush.msra.mxu0 0.0
  %84 = vmatpush.msra.mxu0 %v36
  %85 = vmatpush.msra.mxu0 %v35
  %86 = vmatpush.msra.mxu0 %v34
  %87 = vmatmul.f32.gmra.mxu0 %v43
  %v88 = vpop.f32.mrf.mxu0
  %v89 = vadd.f32 %v66, %v88
  %90 = vmatmul.f32.gmra.mxu0 %v46
  %v91 = vpop.f32.mrf.mxu0
  %v92 = vadd.f32 %v69, %v91
  %93 = vdwg.mxu0
  %vm94 = vcmask 261120
  %95 = vst.msk [vmem:[%s3] sm:$0xff] %vm94, %v89
  %96 = vst.msk [vmem:[%s3 + $0x8] sm:$0xff] %vm94, %v92
  // Predicated region
  $region14: #{forward.11} parent=0 // pred_check
    _
  $region15: #{forward.11} parent=0 // pred_check_branch
    %98 = sbr.rel (0) target = $region17
  $region16: #{forward.11} parent=0 // pred_region
    _
  $region17: #{forward.11} parent=0 // pred_fallthru
    _
  // Predicated region
  $region18: #{forward.11} parent=0 // pred_check
    _
  $region19: #{forward.11} parent=0 // pred_check_branch
    %100 = sbr.rel (0) target = $region21
  $region20: #{forward.11} parent=0 // pred_region
    _
  $region21: #{forward.11} parent=0 // pred_fallthru
    _

// kernel: forward.13
$region0: #{forward.13}
  #allocation0 [shape = 'u32[]', space=smem, size = 0x4, offset = 0x4, fixed_abs, tag = 'smem constant byte address 0x4 - core index']
  #allocation1 [shape = 'u32[72,128]{1,0:T(1,128)}', space=vmem, size = 0x9000, scoped, tag = 'internal scratch']
  #allocation2 [shape = 'f32[1,1]{1,0:T(1,128)S(1)}', space=vmem, size = 0x200, scoped, tag = 'scoped memory for forward.13']
  %s0 = inlined_call_operand.vmem [shape: f32[16,16], index: 0, kind: input, shape index: {}]
  %s1 = inlined_call_operand.vmem [shape: f32[16,8], index: 1, kind: input, shape index: {}]
  %s2 = inlined_call_operand.vmem [shape: f32[1,8], index: 2, kind: input, shape index: {}]
  %s3 = inlined_call_operand.vmem [shape: f32[1,8], index: 3, kind: input, shape index: {}]
  %s4 = inlined_call_operand.<no memory space> [shape: f32[1,1], index: 4, kind: input, shape index: {}]
  %s5 = inlined_call_operand.vmem [shape: f32[16,1], index: 5, kind: output, shape index: {}]
  %s6 = sld [smem:[#allocation0]]
  $region30: #{forward.13} parent=0
    _
  %s8 = ssub.s32 1, %s6
  %s9 = scalar_select 0, %s8, %s6
  %v10 = vstv %s4
  %11 = vst [vmem:[#allocation2] sm:$0x1] %v10
  // Predicated region
  $region2: #{forward.13} parent=0 // pred_check
    _
  $region3: #{forward.13} parent=0 // pred_check_branch
    %13 = sbr.rel (0) target = $region5
  $region4: #{forward.13} parent=0 // pred_region
    _
  $region5: #{forward.13} parent=0 // pred_fallthru
    _
  // Predicated region
  $region6: #{forward.13} parent=0 // pred_check
    _
  $region7: #{forward.13} parent=0 // pred_check_branch
    %15 = sbr.rel (0) target = $region9
  $region8: #{forward.13} parent=0 // pred_region
    _
  $region9: #{forward.13} parent=0 // pred_fallthru
    _
  // Predicated region
  $region10: #{forward.13} parent=0 // pred_check
    _
  $region11: #{forward.13} parent=0 // pred_check_branch
    %17 = sbr.rel (0) target = $region13
  $region12: #{forward.13} parent=0 // pred_region
    _
  $region13: #{forward.13} parent=0 // pred_fallthru
    _
  // Predicated region
  $region14: #{forward.13} parent=0 // pred_check
    _
  $region15: #{forward.13} parent=0 // pred_check_branch
    %19 = sbr.rel (0) target = $region17
  $region16: #{forward.13} parent=0 // pred_region
    _
  $region17: #{forward.13} parent=0 // pred_fallthru
    _
  // Predicated region
  $region18: #{forward.13} parent=0 // pred_check
    _
  $region19: #{forward.13} parent=0 // pred_check_branch
    %21 = sbr.rel (0) target = $region21
  $region20: #{forward.13} parent=0 // pred_region
    _
  $region21: #{forward.13} parent=0 // pred_fallthru
    _
  %v22 = vld [vmem:[%s0] sm:$0xff]
  %v23 = vld [vmem:[%s0 + $0x8] sm:$0xff]
  %v24 = vld [vmem:[%s1] sm:$0xff]
  %v25 = vld [vmem:[%s1 + $0x8] sm:$0xff]
  %v26 = vld [vmem:[%s2] sm:$0x1]
  %v28 = vperm.slane %v26, 0
  %vm30 = vcmask 130048
  %v32 = vsel %vm30, %v22, 0
  %v35 = vsel %vm30, %v23, 0
  %37 = vmatpush.msra.mxu0 0.0
  %38 = vmatpush.msra.mxu0 0.0
  %39 = vmatpush.msra.mxu0 0.0
  %40 = vmatpush.msra.mxu0 0.0
  %41 = vmatpush.msra.mxu0 0.0
  %42 = vmatpush.msra.mxu0 0.0
  %43 = vmatpush.msra.mxu0 0.0
  %44 = vmatpush.msra.mxu0 0.0
  %45 = vmatpush.msra.mxu0 0.0
  %46 = vmatpush.msra.mxu0 0.0
  %47 = vmatpush.msra.mxu0 0.0
  %48 = vmatpush.msra.mxu0 0.0
  %49 = vmatpush.msra.mxu0 0.0
  %50 = vmatpush.msra.mxu0 0.0
  %51 = vmatpush.msra.mxu0 %v25
  %52 = vmatpush.msra.mxu0 %v24
  %53 = vmatmul.f32.gmra.mxu0 %v32
  %v54 = vpop.f32.mrf.mxu0
  %v55 = vadd.f32 %v28, %v54
  %56 = vmatmul.f32.gmra.mxu0 %v35
  %v57 = vpop.f32.mrf.mxu0
  %v58 = vadd.f32 %v28, %v57
  %59 = vdwg.mxu0
  %v60 = vmax.f32 %v55, 0.0
  %v61 = vmax.f32 %v58, 0.0
  %v62 = vld [vmem:[%s3] sm:$0x1]
  %v64 = vperm.slane %v62, 0
  %v66 = vmul.f32 %v60, %v64
  %v67 = vmul.f32 %v61, %v64
  %vm68 = vcmask 64512
  %v69 = vsel %vm68, %v66, 0.0
  %70 = vadd.xlane.f32.xlu0 %v69
  %v71 = vpop.xlane.xlu0 %70
  %v72 = vsel %vm68, %v67, 0.0
  %73 = vadd.xlane.f32.xlu0 %v72
  %v74 = vpop.xlane.xlu0 %73
  %v75 = vld [vmem:[#allocation2] sm:$0x1]
  %v77 = vperm.slane %v75, 0
  %v79 = vadd.f32 %v71, %v77
  %v80 = vadd.f32 %v74, %v77
  %v81 = vxor.u32 %v79, 2147483648
  %v82 = vxor.u32 %v80, 2147483648
  %v83 = vmul.f32 %v81, 1.442695
  %v84 = vpow.pop %v83
  %v85 = vmul.f32 %v82, 1.442695
  %v86 = vpow.pop %v85
  %v87 = vadd.f32 %v84, 1.0
  %v88 = vadd.f32 %v86, 1.0
  %v89 = vrcp.pop %v87
  %v90 = vmul.f32 %v87, %v89
  %v91 = vsub.f32 1.0, %v90
  %v92 = vmul.f32 %v89, %v91
  %v93 = vadd.f32 %v89, %v92
  %vm94 = vweird.f32 %v87
  %vm95 = vweird.f32 %v89
  %vm96 = vmor %vm94, %vm95
  %v97 = vsel %vm96, %v89, %v93
  %v98 = vand.u32 2147483647, %v87
  %vm99 = vcmp.eq.f32.partialorder %v98, 8.507059e+37
  %v100 = vand.u32 %v87, 2147483648
  %v101 = vor.u32 1.1754944e-38, %v100
  %v102 = vsel %vm99, %v101, %v97
  %v103 = vmul.f32 1.0, %v102
  %v104 = vrcp.pop %v88
  %v105 = vmul.f32 %v88, %v104
  %v106 = vsub.f32 1.0, %v105
  %v107 = vmul.f32 %v104, %v106
  %v108 = vadd.f32 %v104, %v107
  %vm109 = vweird.f32 %v88
  %vm110 = vweird.f32 %v104
  %vm111 = vmor %vm109, %vm110
  %v112 = vsel %vm111, %v104, %v108
  %v113 = vand.u32 2147483647, %v88
  %vm114 = vcmp.eq.f32.partialorder %v113, 8.507059e+37
  %v115 = vand.u32 %v88, 2147483648
  %v116 = vor.u32 1.1754944e-38, %v115
  %v117 = vsel %vm114, %v116, %v112
  %v118 = vmul.f32 1.0, %v117
  %vm119 = vcmask 7168
  %120 = vst.msk [vmem:[%s5] sm:$0xff] %vm119, %v103
  %121 = vst.msk [vmem:[%s5 + $0x8] sm:$0xff] %vm119, %v118
  // Predicated region
  $region22: #{forward.13} parent=0 // pred_check
    _
  $region23: #{forward.13} parent=0 // pred_check_branch
    %123 = sbr.rel (0) target = $region25
  $region24: #{forward.13} parent=0 // pred_region
    _
  $region25: #{forward.13} parent=0 // pred_fallthru
    _
  // Predicated region
  $region26: #{forward.13} parent=0 // pred_check
    _
  $region27: #{forward.13} parent=0 // pred_check_branch
    %125 = sbr.rel (0) target = $region29
  $region28: #{forward.13} parent=0 // pred_region
    _
  $region29: #{forward.13} parent=0 // pred_fallthru
    _

// kernel: forward.12
$region0: #{forward.12}
  #allocation0 [shape = 'u32[]', space=smem, size = 0x4, offset = 0x4, fixed_abs, tag = 'smem constant byte address 0x4 - core index']
  #allocation1 [shape = 'u32[72,128]{1,0:T(1,128)}', space=vmem, size = 0x9000, scoped, tag = 'internal scratch']
  #allocation2 [shape = 'f32[2,16]{1,0:T(2,128)}', space=vmem, size = 0x400, scoped, tag = 'scratch operand']
  %s0 = inlined_call_operand.vmem [shape: f32[8,2,32], index: 0, kind: input, shape index: {}]
  %s1 = inlined_call_operand.vmem [shape: f32[32,48], index: 1, kind: input, shape index: {}]
  %s2 = inlined_call_operand.vmem [shape: f32[1,48], index: 2, kind: input, shape index: {}]
  %s3 = inlined_call_operand.vmem [shape: f32[16,48], index: 3, kind: input, shape index: {}]
  %s4 = inlined_call_operand.vmem [shape: f32[1,16], index: 4, kind: input, shape index: {}]
  %s5 = inlined_call_operand.vmem [shape: f32[8,2,16], index: 5, kind: output, shape index: {}]
  %s6 = sld [smem:[#allocation0]]
  $region37: #{forward.12} parent=0
    _
  %s8 = ssub.s32 1, %s6
  %s9 = scalar_select 0, %s8, %s6
  // Predicated region
  $region2: #{forward.12} parent=0 // pred_check
    _
  $region3: #{forward.12} parent=0 // pred_check_branch
    %11 = sbr.rel (0) target = $region5
  $region4: #{forward.12} parent=0 // pred_region
    _
  $region5: #{forward.12} parent=0 // pred_fallthru
    _
  // Predicated region
  $region6: #{forward.12} parent=0 // pred_check
    _
  $region7: #{forward.12} parent=0 // pred_check_branch
    %13 = sbr.rel (0) target = $region9
  $region8: #{forward.12} parent=0 // pred_region
    _
  $region9: #{forward.12} parent=0 // pred_fallthru
    _
  // Predicated region
  $region10: #{forward.12} parent=0 // pred_check
    _
  $region11: #{forward.12} parent=0 // pred_check_branch
    %15 = sbr.rel (0) target = $region13
  $region12: #{forward.12} parent=0 // pred_region
    _
  $region13: #{forward.12} parent=0 // pred_fallthru
    _
  // Predicated region
  $region14: #{forward.12} parent=0 // pred_check
    _
  $region15: #{forward.12} parent=0 // pred_check_branch
    %17 = sbr.rel (0) target = $region17
  $region16: #{forward.12} parent=0 // pred_region
    _
  $region17: #{forward.12} parent=0 // pred_fallthru
    _
  // Predicated region
  $region18: #{forward.12} parent=0 // pred_check
    _
  $region19: #{forward.12} parent=0 // pred_check_branch
    %19 = sbr.rel (0) target = $region21
  $region20: #{forward.12} parent=0 // pred_region
    _
  $region21: #{forward.12} parent=0 // pred_fallthru
    _
  %vm20 = vcmask 123904
  %21 = vst.msk [vmem:[#allocation2] sm:$0x3] %vm20, 0.0
  loop: start=0, step=1, limit=8
  $region22: #{forward.12} parent=0 // loop_pre_header
    _
  $region23: #{forward.12} parent=0 // loop_header
    %s23 = sphi 0, %s27
    %p24 = scmp.ge.s32.totalorder %s23, 8
  $region24: #{forward.12} parent=0 // loop_header_branch
    %26 = sbr.rel (%p24) target = $region28
  $region25: #{forward.12} parent=0 // loop_body
    %s28 = smul.u32 %s23, 2
    %s29 = scalar_lea.vmem %s0, %s28
    %v30 = vld [vmem:[%s29] sm:$0x3]
    %v31 = vld [vmem:[%s1] sm:$0xff]
    %v32 = vld [vmem:[%s1 + $0x8] sm:$0xff]
    %v33 = vld [vmem:[%s1 + $0x10] sm:$0xff]
    %v34 = vld [vmem:[%s1 + $0x18] sm:$0xff]
    %v35 = vld [vmem:[%s2] sm:$0x1]
    %v37 = vperm.slane %v35, 0
    %vm39 = vcmask 261120
    %v41 = vsel %vm39, %v30, 0
    %43 = vmatpush.msra.mxu0 0.0
    %44 = vmatpush.msra.mxu0 0.0
    %45 = vmatpush.msra.mxu0 0.0
    %46 = vmatpush.msra.mxu0 0.0
    %47 = vmatpush.msra.mxu0 0.0
    %48 = vmatpush.msra.mxu0 0.0
    %49 = vmatpush.msra.mxu0 0.0
    %50 = vmatpush.msra.mxu0 0.0
    %51 = vmatpush.msra.mxu0 0.0
    %52 = vmatpush.msra.mxu0 0.0
    %53 = vmatpush.msra.mxu0 0.0
    %54 = vmatpush.msra.mxu0 0.0
    %55 = vmatpush.msra.mxu0 %v34
    %56 = vmatpush.msra.mxu0 %v33
    %57 = vmatpush.msra.mxu0 %v32
    %58 = vmatpush.msra.mxu0 %v31
    %59 = vmatmul.f32.gmra.mxu0 %v41
    %v60 = vpop.f32.mrf.mxu0
    %v61 = vadd.f32 %v37, %v60
    %62 = vdwg.mxu0
    %v63 = vld [vmem:[#allocation2] sm:$0x3]
    %v64 = vld [vmem:[%s3] sm:$0xff]
    %v65 = vld [vmem:[%s3 + $0x8] sm:$0xff]
    %vm66 = vcmask 130048
    %v68 = vsel %vm66, %v63, 0
    %70 = vmatpush.msra.mxu0 0.0
    %71 = vmatpush.msra.mxu0 0.0
    %72 = vmatpush.msra.mxu0 0.0
    %73 = vmatpush.msra.mxu0 0.0
    %74 = vmatpush.msra.mxu0 0.0
    %75 = vmatpush.msra.mxu0 0.0
    %76 = vmatpush.msra.mxu0 0.0
    %77 = vmatpush.msra.mxu0 0.0
    %78 = vmatpush.msra.mxu0 0.0
    %79 = vmatpush.msra.mxu0 0.0
    %80 = vmatpush.msra.mxu0 0.0
    %81 = vmatpush.msra.mxu0 0.0
    %82 = vmatpush.msra.mxu0 0.0
    %83 = vmatpush.msra.mxu0 0.0
    %84 = vmatpush.msra.mxu0 %v65
    %85 = vmatpush.msra.mxu0 %v64
    %86 = vmatmul.f32.gmra.mxu0 %v68
    %v87 = vpop.f32.mrf.mxu0
    %v88 = vadd.f32 0.0, %v87
    %89 = vdwg.mxu0
    %v90 = vadd.f32 %v61, %v88
    %v91 = vxor.u32 %v90, 2147483648
    %v92 = vmul.f32 %v91, 1.442695
    %v93 = vpow.pop %v92
    %v94 = vadd.f32 %v93, 1.0
    %v95 = vrcp.pop %v94
    %v96 = vmul.f32 %v94, %v95
    %v97 = vsub.f32 1.0, %v96
    %v98 = vmul.f32 %v95, %v97
    %v99 = vadd.f32 %v95, %v98
    %vm100 = vweird.f32 %v94
    %vm101 = vweird.f32 %v95
    %vm102 = vmor %vm100, %vm101
    %v103 = vsel %vm102, %v95, %v99
    %v104 = vand.u32 2147483647, %v94
    %vm105 = vcmp.eq.f32.partialorder %v104, 8.507059e+37
    %v106 = vand.u32 %v94, 2147483648
    %v107 = vor.u32 1.1754944e-38, %v106
    %v108 = vsel %vm105, %v107, %v103
    %v109 = vmul.f32 1.0, %v108
    %v110 = vld [vmem:[%s4] sm:$0x1]
    %v112 = vperm.slane %v110, 0
    %113 = vrot.lane.b32.xlu0 %v112, 32
    %v114 = vpop.permute.xlu0 %113
    %v116 = vadd.f32 %v88, %v114
    %118 = vrot.lane.b32.xlu0 %v116, 96
    %v119 = vpop.permute.xlu0 %118
    %v121 = vmul.f32 %v109, %v119
    %123 = vrot.lane.b32.xlu0 %v121, 32
    %v124 = vpop.permute.xlu0 %123
    %v126 = vadd.f32 %v61, %v124
    %v127 = vtanh.pop %v126
    %v128 = vsub.f32 1.0, %v109
    %130 = vrot.lane.b32.xlu0 %v127, 112
    %v131 = vpop.permute.xlu0 %130
    %v133 = vmul.f32 %v128, %v131
    %134 = vrot.lane.b32.xlu0 %v63, 16
    %v135 = vpop.permute.xlu0 %134
    %v137 = vmul.f32 %v109, %v135
    %v138 = vadd.f32 %v133, %v137
    %140 = vrot.lane.b32.xlu0 %v138, 112
    %v141 = vpop.permute.xlu0 %140
    %143 = vst.msk [vmem:[#allocation2] sm:$0x3] %vm20, %v141
    %s144 = scalar_lea.vmem %s5, %s28
    %145 = vst.msk [vmem:[%s144] sm:$0x3] %vm20, %v141
  $region26: #{forward.12} parent=0 // loop_footer
    %s27 = sadd.s32 1, %s23
  $region27: #{forward.12} parent=0 // loop_footer_branch
    %22 = sbr.rel target = $region23
  $region28: #{forward.12} parent=0 // loop_exit
    _
  // Predicated region
  $region29: #{forward.12} parent=0 // pred_check
    _
  $region30: #{forward.12} parent=0 // pred_check_branch
    %147 = sbr.rel (0) target = $region32
  $region31: #{forward.12} parent=0 // pred_region
    _
  $region32: #{forward.12} parent=0 // pred_fallthru
    _
  // Predicated region
  $region33: #{forward.12} parent=0 // pred_check
    _
  $region34: #{forward.12} parent=0 // pred_check_branch
    %149 = sbr.rel (0) target = $region36
  $region35: #{forward.12} parent=0 // pred_region
    _
  $region36: #{forward.12} parent=0 // pred_fallthru
    _

</llo_original>
